<compile_context>
chip_gen: v7x
topology: tpu7x:2x2x1
jax: 0.10.0
libtpu: 0.0.40
codegen_flags: <defaults>
</compile_context>

<pallas_src>
import jax
import jax.numpy as jnp
from jax.experimental import pallas as pl
from jax.experimental.pallas import tpu as pltpu


def gating_kernel(x_ref, w_ih_ref, w_hh_ref, b_ref, w_fc_ref, b_fc_ref, out_ref):
    # x_ref:    (T, I)    batch-0 input, time-major
    # w_ih_ref: (I, 4H)   LSTM input weights (transposed, gate order i,f,o,g)
    # w_hh_ref: (H, 4H)   LSTM recurrent weights (transposed, gate order i,f,o,g)
    # b_ref:    (1, 4H)   b_ih + b_hh (reordered), f32
    # w_fc_ref: (H, E)    gating head weights (transposed)
    # b_fc_ref: (1, E)    f32
    # out_ref:  (T, E)    softmax gating weights for batch element 0
    T = x_ref.shape[0]
    H = w_hh_ref.shape[0]

    # (1) Input projection + bias hoisted off the serial chain: one MXU call.
    #     Kept as a value (T=8, 4H=512 f32 -> 4 vregs), no VMEM scratch round-trip.
    xw = (jnp.dot(x_ref[...], w_ih_ref[...],
                  preferred_element_type=jnp.float32)
          + b_ref[...])                                                 # (T, 4H) f32

    w_hh = w_hh_ref[...]                                                # loop-invariant
    rec_dt = w_hh.dtype

    # (2) Serial LSTM recurrence for batch element 0. T is small and static, so
    #     the loop fully unrolls at trace time: h, c and each stored hidden row
    #     are vreg-resident values with static indices.
    h = jnp.zeros((1, H), jnp.float32)
    c = jnp.zeros((1, H), jnp.float32)
    hs_rows = []
    for t in range(T):
        gates = xw[t:t + 1, :] + jnp.dot(h.astype(rec_dt), w_hh,
                                         preferred_element_type=jnp.float32)  # (1, 4H)
        # Gate order (i, f, o, g): one EUP tanh over the contiguous 3H (i,f,o)
        # block -- sigmoid(x) == 0.5*tanh(0.5*x) + 0.5 (1 push/vreg instead of
        # exp + reciprocal) -- plus one tanh for g.
        sig = 0.5 * jnp.tanh(0.5 * gates[:, :3 * H]) + 0.5
        i_g = sig[:, 0 * H:1 * H]
        f_g = sig[:, 1 * H:2 * H]
        o_g = sig[:, 2 * H:3 * H]
        g_g = jnp.tanh(gates[:, 3 * H:])
        c = f_g * c + i_g * g_g
        h = o_g * jnp.tanh(c)
        hs_rows.append(h)
    hs = jnp.concatenate(hs_rows, axis=0)                               # (T, H) f32

    # (3) Gating head: Linear(H -> E) + Softmax(dim=1) on the batch-0 states.
    #     E=4 -> masked (4/128-lane) store; fine at this size (pad E to 128 via the
    #     out spec only if num_experts ever grows).
    logits = (jnp.dot(hs.astype(w_fc_ref.dtype), w_fc_ref[...],
                      preferred_element_type=jnp.float32)
              + b_fc_ref[...])                                          # (T, E)
    m = jnp.max(logits, axis=1, keepdims=True)
    e = jnp.exp(logits - m)
    s = jnp.sum(e, axis=1, keepdims=True)
    r = pl.reciprocal(s, approx=True)          # EUP slot
    r = r * (2.0 - s * r)                      # one Newton step -> f32-accurate
    out_ref[...] = e * r                       # Softmax(dim=1)


def _reorder_gates(w):
    """Permute PyTorch LSTM gate blocks (i, f, g, o) -> (i, f, o, g) along axis 0."""
    i, f, g, o = jnp.split(w, 4, axis=0)
    return jnp.concatenate([i, f, o, g], axis=0)


def gating_forward(x, params, *, mxu_dtype=jnp.float32,
                   recurrent_dtype=jnp.float32):
    """x: (B, T, I) batch-first float32, like the PyTorch module.

    mxu_dtype:       operand dtype for the two non-recurrent matmuls (input
                     projection and FC head); bf16 is the native MXU rate on
                     v6e/v7x.
    recurrent_dtype: operand dtype for the serial h @ W_hh dot. Default f32 to
                     bound drift; bf16 is worthwhile on v5e where an f32-operand
                     matmul costs ~3x the vmatmul pushes (validate tolerance).
    Accumulation is always f32 (preferred_element_type).
    """
    B, T, I = x.shape
    H = params["w_hh"].shape[1]
    E = params["w_fc"].shape[0]
    # Lane alignment: gate slices (3H contiguous sigmoid block, H-wide subslices)
    # must not straddle 128-lane boundaries.
    assert H % 128 == 0, f"hidden_size must be a multiple of 128, got {H}"

    # Only output[0] feeds the gating head -> drop the batch dimension entirely.
    x0 = x[0].astype(mxu_dtype)                                         # (T, I)

    w_ih_t = _reorder_gates(params["w_ih"]).T.astype(mxu_dtype)         # (I, 4H)
    w_hh_t = _reorder_gates(params["w_hh"]).T.astype(recurrent_dtype)   # (H, 4H)
    b = _reorder_gates(params["b_ih"] + params["b_hh"]
                       ).reshape(1, 4 * H).astype(jnp.float32)          # (1, 4H)
    w_fc_t = params["w_fc"].T.astype(mxu_dtype)                         # (H, E)
    b_fc = params["b_fc"].reshape(1, E).astype(jnp.float32)             # (1, E)

    vmem = pl.BlockSpec(memory_space=pltpu.MemorySpace.VMEM)
    return pl.pallas_call(
        gating_kernel,
        out_shape=jax.ShapeDtypeStruct((T, E), jnp.float32),
        in_specs=[vmem] * 6,
        out_specs=vmem,
    )(x0, w_ih_t, w_hh_t, b, w_fc_t, b_fc)


def gating_reference(x, params):
    """Pure-JAX reference matching PyTorch nn.LSTM + Linear + Softmax semantics."""
    B, T, _ = x.shape
    H = params["w_hh"].shape[1]
    hi = jax.lax.Precision.HIGHEST
    w_ih, w_hh = params["w_ih"], params["w_hh"]
    b = params["b_ih"] + params["b_hh"]
    h = jnp.zeros((B, H), jnp.float32)
    c = jnp.zeros((B, H), jnp.float32)
    hs = []
    for t in range(T):
        gates = (jnp.dot(x[:, t, :], w_ih.T, precision=hi)
                 + jnp.dot(h, w_hh.T, precision=hi) + b)
        i = jax.nn.sigmoid(gates[:, :H])
        f = jax.nn.sigmoid(gates[:, H:2 * H])
        g = jnp.tanh(gates[:, 2 * H:3 * H])
        o = jax.nn.sigmoid(gates[:, 3 * H:])
        c = f * c + i * g
        h = o * jnp.tanh(c)
        hs.append(h[0])
    hs = jnp.stack(hs)                                                  # (T, H)
    logits = jnp.dot(hs, params["w_fc"].T, precision=hi) + params["b_fc"]
    return jax.nn.softmax(logits, axis=1)


def init_params(key, input_size, hidden_size, num_experts):
    """Deterministic init matching PyTorch shapes (uniform(-1/sqrt(H), 1/sqrt(H)))."""
    ks = jax.random.split(key, 6)
    s = 1.0 / jnp.sqrt(hidden_size)
    u = lambda k, shape: jax.random.uniform(k, shape, jnp.float32, -s, s)
    return {
        "w_ih": u(ks[0], (4 * hidden_size, input_size)),
        "w_hh": u(ks[1], (4 * hidden_size, hidden_size)),
        "b_ih": u(ks[2], (4 * hidden_size,)),
        "b_hh": u(ks[3], (4 * hidden_size,)),
        "w_fc": u(ks[4], (num_experts, hidden_size)),
        "b_fc": u(ks[5], (num_experts,)),
    }


if __name__ == "__main__":
    B, T, I = 2, 8, 14          # batch, seq, input_size (module default input_size=14)
    H, E = 128, 4               # hidden_size (lane-aligned), num_experts

    root = jax.random.PRNGKey(0)
    k_x, k_p = jax.random.split(root)
    x = jax.random.normal(k_x, (B, T, I), jnp.float32)
    params = init_params(k_p, I, H, E)

    ref = gating_reference(x, params)

    # f32 everywhere: tight check against the pure-JAX reference.
    out = jax.block_until_ready(gating_forward(x, params))
    assert out.shape == (T, E), out.shape
    assert jnp.allclose(out, ref, atol=1e-4, rtol=1e-4), (out, ref)
    assert jnp.allclose(jnp.sum(out, axis=1), jnp.ones((T,)), atol=1e-4)

    # bf16 operands for the non-recurrent matmuls (native v6e/v7x MXU rate);
    # recurrence stays f32 -> relaxed tolerance only for the bf16 quantization.
    out_bf16 = jax.block_until_ready(
        gating_forward(x, params, mxu_dtype=jnp.bfloat16))
    assert jnp.allclose(out_bf16, ref, atol=5e-2, rtol=0.0), (out_bf16, ref)

    # Fully-bf16 operand path (what the review suggests enabling on v5e to avoid
    # the ~3x f32-matmul emulation cost); f32 accumulation keeps drift small.
    out_bf16_rec = jax.block_until_ready(
        gating_forward(x, params, mxu_dtype=jnp.bfloat16,
                       recurrent_dtype=jnp.bfloat16))
    assert jnp.allclose(out_bf16_rec, ref, atol=5e-2, rtol=0.0), (out_bf16_rec, ref)

    print("KERNEL_OK")
</pallas_src>

<mosaic_0001>
module attributes {stable_mosaic.version = 11 : i64} {
  func.func @gating_kernel(%arg0: memref<8x14xf32, #tpu.memory_space<vmem>>, %arg1: memref<14x512xf32, #tpu.memory_space<vmem>>, %arg2: memref<128x512xf32, #tpu.memory_space<vmem>>, %arg3: memref<1x512xf32, #tpu.memory_space<vmem>>, %arg4: memref<128x4xf32, #tpu.memory_space<vmem>>, %arg5: memref<1x4xf32, #tpu.memory_space<vmem>>, %arg6: memref<8x4xf32, #tpu.memory_space<vmem>>) attributes {dimension_semantics = [], scalar_prefetch = 0 : i64, scratch_operands = 0 : i64, tpu.core_type = #tpu.core_type<tc>} {
    %c0 = arith.constant 0 : index
    %c0_0 = arith.constant 0 : index
    %0 = vector.load %arg0[%c0, %c0_0] : memref<8x14xf32, #tpu.memory_space<vmem>>, vector<8x14xf32>
    %c0_1 = arith.constant 0 : index
    %c0_2 = arith.constant 0 : index
    %1 = vector.load %arg1[%c0_1, %c0_2] : memref<14x512xf32, #tpu.memory_space<vmem>>, vector<14x512xf32>
    %cst = arith.constant dense<0.000000e+00> : vector<8x512xf32>
    %2 = tpu.matmul %0, %1, %cst {dimension_numbers = #tpu.dot_dimension_numbers<[1], [0], [0], [1], [0, 0, 1, 1], [], []>} : vector<8x14xf32>, vector<14x512xf32>, vector<8x512xf32> -> vector<8x512xf32>
    %c0_3 = arith.constant 0 : index
    %c0_4 = arith.constant 0 : index
    %3 = vector.load %arg3[%c0_3, %c0_4] : memref<1x512xf32, #tpu.memory_space<vmem>>, vector<1x512xf32>
    %4 = vector.broadcast %3 : vector<1x512xf32> to vector<8x512xf32>
    %5 = arith.addf %2, %4 : vector<8x512xf32>
    %c0_5 = arith.constant 0 : index
    %c0_6 = arith.constant 0 : index
    %6 = vector.load %arg2[%c0_5, %c0_6] : memref<128x512xf32, #tpu.memory_space<vmem>>, vector<128x512xf32>
    %cst_7 = arith.constant 0.000000e+00 : f32
    %7 = vector.broadcast %cst_7 : f32 to vector<1x128xf32>
    %cst_8 = arith.constant 0.000000e+00 : f32
    %8 = vector.broadcast %cst_8 : f32 to vector<1x128xf32>
    %9 = vector.extract_strided_slice %5 {offsets = [0, 0], sizes = [1, 512], strides = [1, 1]} : vector<8x512xf32> to vector<1x512xf32>
    %cst_9 = arith.constant dense<0.000000e+00> : vector<1x512xf32>
    %10 = tpu.matmul %7, %6, %cst_9 {dimension_numbers = #tpu.dot_dimension_numbers<[1], [0], [0], [1], [0, 0, 1, 1], [], []>} : vector<1x128xf32>, vector<128x512xf32>, vector<1x512xf32> -> vector<1x512xf32>
    %11 = arith.addf %9, %10 : vector<1x512xf32>
    %12 = vector.extract_strided_slice %11 {offsets = [0, 0], sizes = [1, 384], strides = [1, 1]} : vector<1x512xf32> to vector<1x384xf32>
    %cst_10 = arith.constant 5.000000e-01 : f32
    %13 = vector.broadcast %cst_10 : f32 to vector<1x384xf32>
    %14 = arith.mulf %13, %12 : vector<1x384xf32>
    %15 = math.tanh %14 : vector<1x384xf32>
    %cst_11 = arith.constant 5.000000e-01 : f32
    %16 = vector.broadcast %cst_11 : f32 to vector<1x384xf32>
    %17 = arith.mulf %16, %15 : vector<1x384xf32>
    %cst_12 = arith.constant 5.000000e-01 : f32
    %18 = vector.broadcast %cst_12 : f32 to vector<1x384xf32>
    %19 = arith.addf %17, %18 : vector<1x384xf32>
    %20 = vector.extract_strided_slice %19 {offsets = [0, 0], sizes = [1, 128], strides = [1, 1]} : vector<1x384xf32> to vector<1x128xf32>
    %21 = vector.extract_strided_slice %19 {offsets = [0, 128], sizes = [1, 128], strides = [1, 1]} : vector<1x384xf32> to vector<1x128xf32>
    %22 = vector.extract_strided_slice %19 {offsets = [0, 256], sizes = [1, 128], strides = [1, 1]} : vector<1x384xf32> to vector<1x128xf32>
    %23 = vector.extract_strided_slice %11 {offsets = [0, 384], sizes = [1, 128], strides = [1, 1]} : vector<1x512xf32> to vector<1x128xf32>
    %24 = math.tanh %23 : vector<1x128xf32>
    %25 = arith.mulf %21, %8 : vector<1x128xf32>
    %26 = arith.mulf %20, %24 : vector<1x128xf32>
    %27 = arith.addf %25, %26 : vector<1x128xf32>
    %28 = math.tanh %27 : vector<1x128xf32>
    %29 = arith.mulf %22, %28 : vector<1x128xf32>
    %30 = vector.extract_strided_slice %5 {offsets = [1, 0], sizes = [1, 512], strides = [1, 1]} : vector<8x512xf32> to vector<1x512xf32>
    %cst_13 = arith.constant dense<0.000000e+00> : vector<1x512xf32>
    %31 = tpu.matmul %29, %6, %cst_13 {dimension_numbers = #tpu.dot_dimension_numbers<[1], [0], [0], [1], [0, 0, 1, 1], [], []>} : vector<1x128xf32>, vector<128x512xf32>, vector<1x512xf32> -> vector<1x512xf32>
    %32 = arith.addf %30, %31 : vector<1x512xf32>
    %33 = vector.extract_strided_slice %32 {offsets = [0, 0], sizes = [1, 384], strides = [1, 1]} : vector<1x512xf32> to vector<1x384xf32>
    %cst_14 = arith.constant 5.000000e-01 : f32
    %34 = vector.broadcast %cst_14 : f32 to vector<1x384xf32>
    %35 = arith.mulf %34, %33 : vector<1x384xf32>
    %36 = math.tanh %35 : vector<1x384xf32>
    %cst_15 = arith.constant 5.000000e-01 : f32
    %37 = vector.broadcast %cst_15 : f32 to vector<1x384xf32>
    %38 = arith.mulf %37, %36 : vector<1x384xf32>
    %cst_16 = arith.constant 5.000000e-01 : f32
    %39 = vector.broadcast %cst_16 : f32 to vector<1x384xf32>
    %40 = arith.addf %38, %39 : vector<1x384xf32>
    %41 = vector.extract_strided_slice %40 {offsets = [0, 0], sizes = [1, 128], strides = [1, 1]} : vector<1x384xf32> to vector<1x128xf32>
    %42 = vector.extract_strided_slice %40 {offsets = [0, 128], sizes = [1, 128], strides = [1, 1]} : vector<1x384xf32> to vector<1x128xf32>
    %43 = vector.extract_strided_slice %40 {offsets = [0, 256], sizes = [1, 128], strides = [1, 1]} : vector<1x384xf32> to vector<1x128xf32>
    %44 = vector.extract_strided_slice %32 {offsets = [0, 384], sizes = [1, 128], strides = [1, 1]} : vector<1x512xf32> to vector<1x128xf32>
    %45 = math.tanh %44 : vector<1x128xf32>
    %46 = arith.mulf %42, %27 : vector<1x128xf32>
    %47 = arith.mulf %41, %45 : vector<1x128xf32>
    %48 = arith.addf %46, %47 : vector<1x128xf32>
    %49 = math.tanh %48 : vector<1x128xf32>
    %50 = arith.mulf %43, %49 : vector<1x128xf32>
    %51 = vector.extract_strided_slice %5 {offsets = [2, 0], sizes = [1, 512], strides = [1, 1]} : vector<8x512xf32> to vector<1x512xf32>
    %cst_17 = arith.constant dense<0.000000e+00> : vector<1x512xf32>
    %52 = tpu.matmul %50, %6, %cst_17 {dimension_numbers = #tpu.dot_dimension_numbers<[1], [0], [0], [1], [0, 0, 1, 1], [], []>} : vector<1x128xf32>, vector<128x512xf32>, vector<1x512xf32> -> vector<1x512xf32>
    %53 = arith.addf %51, %52 : vector<1x512xf32>
    %54 = vector.extract_strided_slice %53 {offsets = [0, 0], sizes = [1, 384], strides = [1, 1]} : vector<1x512xf32> to vector<1x384xf32>
    %cst_18 = arith.constant 5.000000e-01 : f32
    %55 = vector.broadcast %cst_18 : f32 to vector<1x384xf32>
    %56 = arith.mulf %55, %54 : vector<1x384xf32>
    %57 = math.tanh %56 : vector<1x384xf32>
    %cst_19 = arith.constant 5.000000e-01 : f32
    %58 = vector.broadcast %cst_19 : f32 to vector<1x384xf32>
    %59 = arith.mulf %58, %57 : vector<1x384xf32>
    %cst_20 = arith.constant 5.000000e-01 : f32
    %60 = vector.broadcast %cst_20 : f32 to vector<1x384xf32>
    %61 = arith.addf %59, %60 : vector<1x384xf32>
    %62 = vector.extract_strided_slice %61 {offsets = [0, 0], sizes = [1, 128], strides = [1, 1]} : vector<1x384xf32> to vector<1x128xf32>
    %63 = vector.extract_strided_slice %61 {offsets = [0, 128], sizes = [1, 128], strides = [1, 1]} : vector<1x384xf32> to vector<1x128xf32>
    %64 = vector.extract_strided_slice %61 {offsets = [0, 256], sizes = [1, 128], strides = [1, 1]} : vector<1x384xf32> to vector<1x128xf32>
    %65 = vector.extract_strided_slice %53 {offsets = [0, 384], sizes = [1, 128], strides = [1, 1]} : vector<1x512xf32> to vector<1x128xf32>
    %66 = math.tanh %65 : vector<1x128xf32>
    %67 = arith.mulf %63, %48 : vector<1x128xf32>
    %68 = arith.mulf %62, %66 : vector<1x128xf32>
    %69 = arith.addf %67, %68 : vector<1x128xf32>
    %70 = math.tanh %69 : vector<1x128xf32>
    %71 = arith.mulf %64, %70 : vector<1x128xf32>
    %72 = vector.extract_strided_slice %5 {offsets = [3, 0], sizes = [1, 512], strides = [1, 1]} : vector<8x512xf32> to vector<1x512xf32>
    %cst_21 = arith.constant dense<0.000000e+00> : vector<1x512xf32>
    %73 = tpu.matmul %71, %6, %cst_21 {dimension_numbers = #tpu.dot_dimension_numbers<[1], [0], [0], [1], [0, 0, 1, 1], [], []>} : vector<1x128xf32>, vector<128x512xf32>, vector<1x512xf32> -> vector<1x512xf32>
    %74 = arith.addf %72, %73 : vector<1x512xf32>
    %75 = vector.extract_strided_slice %74 {offsets = [0, 0], sizes = [1, 384], strides = [1, 1]} : vector<1x512xf32> to vector<1x384xf32>
    %cst_22 = arith.constant 5.000000e-01 : f32
    %76 = vector.broadcast %cst_22 : f32 to vector<1x384xf32>
    %77 = arith.mulf %76, %75 : vector<1x384xf32>
    %78 = math.tanh %77 : vector<1x384xf32>
    %cst_23 = arith.constant 5.000000e-01 : f32
    %79 = vector.broadcast %cst_23 : f32 to vector<1x384xf32>
    %80 = arith.mulf %79, %78 : vector<1x384xf32>
    %cst_24 = arith.constant 5.000000e-01 : f32
    %81 = vector.broadcast %cst_24 : f32 to vector<1x384xf32>
    %82 = arith.addf %80, %81 : vector<1x384xf32>
    %83 = vector.extract_strided_slice %82 {offsets = [0, 0], sizes = [1, 128], strides = [1, 1]} : vector<1x384xf32> to vector<1x128xf32>
    %84 = vector.extract_strided_slice %82 {offsets = [0, 128], sizes = [1, 128], strides = [1, 1]} : vector<1x384xf32> to vector<1x128xf32>
    %85 = vector.extract_strided_slice %82 {offsets = [0, 256], sizes = [1, 128], strides = [1, 1]} : vector<1x384xf32> to vector<1x128xf32>
    %86 = vector.extract_strided_slice %74 {offsets = [0, 384], sizes = [1, 128], strides = [1, 1]} : vector<1x512xf32> to vector<1x128xf32>
    %87 = math.tanh %86 : vector<1x128xf32>
    %88 = arith.mulf %84, %69 : vector<1x128xf32>
    %89 = arith.mulf %83, %87 : vector<1x128xf32>
    %90 = arith.addf %88, %89 : vector<1x128xf32>
    %91 = math.tanh %90 : vector<1x128xf32>
    %92 = arith.mulf %85, %91 : vector<1x128xf32>
    %93 = vector.extract_strided_slice %5 {offsets = [4, 0], sizes = [1, 512], strides = [1, 1]} : vector<8x512xf32> to vector<1x512xf32>
    %cst_25 = arith.constant dense<0.000000e+00> : vector<1x512xf32>
    %94 = tpu.matmul %92, %6, %cst_25 {dimension_numbers = #tpu.dot_dimension_numbers<[1], [0], [0], [1], [0, 0, 1, 1], [], []>} : vector<1x128xf32>, vector<128x512xf32>, vector<1x512xf32> -> vector<1x512xf32>
    %95 = arith.addf %93, %94 : vector<1x512xf32>
    %96 = vector.extract_strided_slice %95 {offsets = [0, 0], sizes = [1, 384], strides = [1, 1]} : vector<1x512xf32> to vector<1x384xf32>
    %cst_26 = arith.constant 5.000000e-01 : f32
    %97 = vector.broadcast %cst_26 : f32 to vector<1x384xf32>
    %98 = arith.mulf %97, %96 : vector<1x384xf32>
    %99 = math.tanh %98 : vector<1x384xf32>
    %cst_27 = arith.constant 5.000000e-01 : f32
    %100 = vector.broadcast %cst_27 : f32 to vector<1x384xf32>
    %101 = arith.mulf %100, %99 : vector<1x384xf32>
    %cst_28 = arith.constant 5.000000e-01 : f32
    %102 = vector.broadcast %cst_28 : f32 to vector<1x384xf32>
    %103 = arith.addf %101, %102 : vector<1x384xf32>
    %104 = vector.extract_strided_slice %103 {offsets = [0, 0], sizes = [1, 128], strides = [1, 1]} : vector<1x384xf32> to vector<1x128xf32>
    %105 = vector.extract_strided_slice %103 {offsets = [0, 128], sizes = [1, 128], strides = [1, 1]} : vector<1x384xf32> to vector<1x128xf32>
    %106 = vector.extract_strided_slice %103 {offsets = [0, 256], sizes = [1, 128], strides = [1, 1]} : vector<1x384xf32> to vector<1x128xf32>
    %107 = vector.extract_strided_slice %95 {offsets = [0, 384], sizes = [1, 128], strides = [1, 1]} : vector<1x512xf32> to vector<1x128xf32>
    %108 = math.tanh %107 : vector<1x128xf32>
    %109 = arith.mulf %105, %90 : vector<1x128xf32>
    %110 = arith.mulf %104, %108 : vector<1x128xf32>
    %111 = arith.addf %109, %110 : vector<1x128xf32>
    %112 = math.tanh %111 : vector<1x128xf32>
    %113 = arith.mulf %106, %112 : vector<1x128xf32>
    %114 = vector.extract_strided_slice %5 {offsets = [5, 0], sizes = [1, 512], strides = [1, 1]} : vector<8x512xf32> to vector<1x512xf32>
    %cst_29 = arith.constant dense<0.000000e+00> : vector<1x512xf32>
    %115 = tpu.matmul %113, %6, %cst_29 {dimension_numbers = #tpu.dot_dimension_numbers<[1], [0], [0], [1], [0, 0, 1, 1], [], []>} : vector<1x128xf32>, vector<128x512xf32>, vector<1x512xf32> -> vector<1x512xf32>
    %116 = arith.addf %114, %115 : vector<1x512xf32>
    %117 = vector.extract_strided_slice %116 {offsets = [0, 0], sizes = [1, 384], strides = [1, 1]} : vector<1x512xf32> to vector<1x384xf32>
    %cst_30 = arith.constant 5.000000e-01 : f32
    %118 = vector.broadcast %cst_30 : f32 to vector<1x384xf32>
    %119 = arith.mulf %118, %117 : vector<1x384xf32>
    %120 = math.tanh %119 : vector<1x384xf32>
    %cst_31 = arith.constant 5.000000e-01 : f32
    %121 = vector.broadcast %cst_31 : f32 to vector<1x384xf32>
    %122 = arith.mulf %121, %120 : vector<1x384xf32>
    %cst_32 = arith.constant 5.000000e-01 : f32
    %123 = vector.broadcast %cst_32 : f32 to vector<1x384xf32>
    %124 = arith.addf %122, %123 : vector<1x384xf32>
    %125 = vector.extract_strided_slice %124 {offsets = [0, 0], sizes = [1, 128], strides = [1, 1]} : vector<1x384xf32> to vector<1x128xf32>
    %126 = vector.extract_strided_slice %124 {offsets = [0, 128], sizes = [1, 128], strides = [1, 1]} : vector<1x384xf32> to vector<1x128xf32>
    %127 = vector.extract_strided_slice %124 {offsets = [0, 256], sizes = [1, 128], strides = [1, 1]} : vector<1x384xf32> to vector<1x128xf32>
    %128 = vector.extract_strided_slice %116 {offsets = [0, 384], sizes = [1, 128], strides = [1, 1]} : vector<1x512xf32> to vector<1x128xf32>
    %129 = math.tanh %128 : vector<1x128xf32>
    %130 = arith.mulf %126, %111 : vector<1x128xf32>
    %131 = arith.mulf %125, %129 : vector<1x128xf32>
    %132 = arith.addf %130, %131 : vector<1x128xf32>
    %133 = math.tanh %132 : vector<1x128xf32>
    %134 = arith.mulf %127, %133 : vector<1x128xf32>
    %135 = vector.extract_strided_slice %5 {offsets = [6, 0], sizes = [1, 512], strides = [1, 1]} : vector<8x512xf32> to vector<1x512xf32>
    %cst_33 = arith.constant dense<0.000000e+00> : vector<1x512xf32>
    %136 = tpu.matmul %134, %6, %cst_33 {dimension_numbers = #tpu.dot_dimension_numbers<[1], [0], [0], [1], [0, 0, 1, 1], [], []>} : vector<1x128xf32>, vector<128x512xf32>, vector<1x512xf32> -> vector<1x512xf32>
    %137 = arith.addf %135, %136 : vector<1x512xf32>
    %138 = vector.extract_strided_slice %137 {offsets = [0, 0], sizes = [1, 384], strides = [1, 1]} : vector<1x512xf32> to vector<1x384xf32>
    %cst_34 = arith.constant 5.000000e-01 : f32
    %139 = vector.broadcast %cst_34 : f32 to vector<1x384xf32>
    %140 = arith.mulf %139, %138 : vector<1x384xf32>
    %141 = math.tanh %140 : vector<1x384xf32>
    %cst_35 = arith.constant 5.000000e-01 : f32
    %142 = vector.broadcast %cst_35 : f32 to vector<1x384xf32>
    %143 = arith.mulf %142, %141 : vector<1x384xf32>
    %cst_36 = arith.constant 5.000000e-01 : f32
    %144 = vector.broadcast %cst_36 : f32 to vector<1x384xf32>
    %145 = arith.addf %143, %144 : vector<1x384xf32>
    %146 = vector.extract_strided_slice %145 {offsets = [0, 0], sizes = [1, 128], strides = [1, 1]} : vector<1x384xf32> to vector<1x128xf32>
    %147 = vector.extract_strided_slice %145 {offsets = [0, 128], sizes = [1, 128], strides = [1, 1]} : vector<1x384xf32> to vector<1x128xf32>
    %148 = vector.extract_strided_slice %145 {offsets = [0, 256], sizes = [1, 128], strides = [1, 1]} : vector<1x384xf32> to vector<1x128xf32>
    %149 = vector.extract_strided_slice %137 {offsets = [0, 384], sizes = [1, 128], strides = [1, 1]} : vector<1x512xf32> to vector<1x128xf32>
    %150 = math.tanh %149 : vector<1x128xf32>
    %151 = arith.mulf %147, %132 : vector<1x128xf32>
    %152 = arith.mulf %146, %150 : vector<1x128xf32>
    %153 = arith.addf %151, %152 : vector<1x128xf32>
    %154 = math.tanh %153 : vector<1x128xf32>
    %155 = arith.mulf %148, %154 : vector<1x128xf32>
    %156 = vector.extract_strided_slice %5 {offsets = [7, 0], sizes = [1, 512], strides = [1, 1]} : vector<8x512xf32> to vector<1x512xf32>
    %cst_37 = arith.constant dense<0.000000e+00> : vector<1x512xf32>
    %157 = tpu.matmul %155, %6, %cst_37 {dimension_numbers = #tpu.dot_dimension_numbers<[1], [0], [0], [1], [0, 0, 1, 1], [], []>} : vector<1x128xf32>, vector<128x512xf32>, vector<1x512xf32> -> vector<1x512xf32>
    %158 = arith.addf %156, %157 : vector<1x512xf32>
    %159 = vector.extract_strided_slice %158 {offsets = [0, 0], sizes = [1, 384], strides = [1, 1]} : vector<1x512xf32> to vector<1x384xf32>
    %cst_38 = arith.constant 5.000000e-01 : f32
    %160 = vector.broadcast %cst_38 : f32 to vector<1x384xf32>
    %161 = arith.mulf %160, %159 : vector<1x384xf32>
    %162 = math.tanh %161 : vector<1x384xf32>
    %cst_39 = arith.constant 5.000000e-01 : f32
    %163 = vector.broadcast %cst_39 : f32 to vector<1x384xf32>
    %164 = arith.mulf %163, %162 : vector<1x384xf32>
    %cst_40 = arith.constant 5.000000e-01 : f32
    %165 = vector.broadcast %cst_40 : f32 to vector<1x384xf32>
    %166 = arith.addf %164, %165 : vector<1x384xf32>
    %167 = vector.extract_strided_slice %166 {offsets = [0, 0], sizes = [1, 128], strides = [1, 1]} : vector<1x384xf32> to vector<1x128xf32>
    %168 = vector.extract_strided_slice %166 {offsets = [0, 128], sizes = [1, 128], strides = [1, 1]} : vector<1x384xf32> to vector<1x128xf32>
    %169 = vector.extract_strided_slice %166 {offsets = [0, 256], sizes = [1, 128], strides = [1, 1]} : vector<1x384xf32> to vector<1x128xf32>
    %170 = vector.extract_strided_slice %158 {offsets = [0, 384], sizes = [1, 128], strides = [1, 1]} : vector<1x512xf32> to vector<1x128xf32>
    %171 = math.tanh %170 : vector<1x128xf32>
    %172 = arith.mulf %168, %153 : vector<1x128xf32>
    %173 = arith.mulf %167, %171 : vector<1x128xf32>
    %174 = arith.addf %172, %173 : vector<1x128xf32>
    %175 = math.tanh %174 : vector<1x128xf32>
    %176 = arith.mulf %169, %175 : vector<1x128xf32>
    %177 = tpu.concatenate %29, %50, %71, %92, %113, %134, %155, %176 in 0 : vector<1x128xf32>, vector<1x128xf32>, vector<1x128xf32>, vector<1x128xf32>, vector<1x128xf32>, vector<1x128xf32>, vector<1x128xf32>, vector<1x128xf32> -> vector<8x128xf32>
    %c0_41 = arith.constant 0 : index
    %c0_42 = arith.constant 0 : index
    %178 = vector.load %arg4[%c0_41, %c0_42] : memref<128x4xf32, #tpu.memory_space<vmem>>, vector<128x4xf32>
    %cst_43 = arith.constant dense<0.000000e+00> : vector<8x4xf32>
    %179 = tpu.matmul %177, %178, %cst_43 {dimension_numbers = #tpu.dot_dimension_numbers<[1], [0], [0], [1], [0, 0, 1, 1], [], []>} : vector<8x128xf32>, vector<128x4xf32>, vector<8x4xf32> -> vector<8x4xf32>
    %c0_44 = arith.constant 0 : index
    %c0_45 = arith.constant 0 : index
    %180 = vector.load %arg5[%c0_44, %c0_45] : memref<1x4xf32, #tpu.memory_space<vmem>>, vector<1x4xf32>
    %181 = vector.broadcast %180 : vector<1x4xf32> to vector<8x4xf32>
    %182 = arith.addf %179, %181 : vector<8x4xf32>
    %cst_46 = arith.constant dense<0xFF800000> : vector<8xf32>
    %183 = vector.multi_reduction <maximumf>, %182, %cst_46 [1] : vector<8x4xf32> to vector<8xf32>
    %184 = vector.shape_cast %183 : vector<8xf32> to vector<8x1xf32>
    %185 = vector.broadcast %184 : vector<8x1xf32> to vector<8x4xf32>
    %186 = arith.subf %182, %185 : vector<8x4xf32>
    %187 = math.exp %186 : vector<8x4xf32>
    %cst_47 = arith.constant dense<0.000000e+00> : vector<8xf32>
    %188 = vector.multi_reduction <add>, %187, %cst_47 [1] : vector<8x4xf32> to vector<8xf32>
    %189 = vector.shape_cast %188 : vector<8xf32> to vector<8x1xf32>
    %190 = tpu.reciprocal %189 {approx = true} : vector<8x1xf32> -> vector<8x1xf32>
    %191 = arith.mulf %189, %190 : vector<8x1xf32>
    %cst_48 = arith.constant 2.000000e+00 : f32
    %192 = vector.broadcast %cst_48 : f32 to vector<8x1xf32>
    %193 = arith.subf %192, %191 : vector<8x1xf32>
    %194 = arith.mulf %190, %193 : vector<8x1xf32>
    %195 = vector.broadcast %194 : vector<8x1xf32> to vector<8x4xf32>
    %196 = arith.mulf %187, %195 : vector<8x4xf32>
    %c0_49 = arith.constant 0 : index
    %c0_50 = arith.constant 0 : index
    %197 = vector.load %arg6[%c0_49, %c0_50] : memref<8x4xf32, #tpu.memory_space<vmem>>, vector<8x4xf32>
    tpu.vector_store %arg6[%c0_49, %c0_50], %196 {strides = array<i32>} : memref<8x4xf32, #tpu.memory_space<vmem>>, vector<8x4xf32>,
    return
  }
}

</mosaic_0001>

<llo_original>
// kernel: tpu_custom_call.1
$region0: #{tpu_custom_call.1}
  #allocation0 [shape = 'u32[]', space=smem, size = 0x4, offset = 0x4, fixed_abs, tag = 'smem constant byte address 0x4 - core index']
  #allocation1 [shape = 'u32[144,128]{1,0:T(1,128)}', space=vmem, size = 0x12000, scoped, tag = 'internal scratch']
  %s0 = inlined_call_operand.vmem [shape: f32[8,14], index: 0, kind: input, shape index: {}]
  %s1 = inlined_call_operand.vmem [shape: f32[14,512], index: 1, kind: input, shape index: {}]
  %s2 = inlined_call_operand.hbm [shape: f32[128,512], index: 2, kind: input, shape index: {}]
  %s3 = inlined_call_operand.vmem [shape: f32[1,512], index: 3, kind: input, shape index: {}]
  %s4 = inlined_call_operand.vmem [shape: f32[128,4], index: 4, kind: input, shape index: {}]
  %s5 = inlined_call_operand.vmem [shape: f32[1,4], index: 5, kind: input, shape index: {}]
  %s6 = inlined_call_operand.vmem [shape: f32[8,4], index: 6, kind: output, shape index: {}]
  %s7 = sld [smem:[#allocation0]]
  $region38: #{tpu_custom_call.1} parent=0
    _
  %s9 = ssub.s32 1, %s7
  %s10 = scalar_select 0, %s9, %s7
  $region1: #{tpu_custom_call.1} parent=0
    #allocation2 [shape = 'u8[262144]{0}', space=vmem, size = 0x40000, scoped, tag = 'input window, operand 2, single buffered']
    #allocation3 [shape = 's32[1]{0}', space=sflag, size = 0x4, scoped, tag = 'scoped memory for tpu_custom_call.1']
    %11 = vsyncpa [#allocation3], 0
    // Predicated region
    $region2: #{tpu_custom_call.1} parent=1 // pred_check
      _
    $region3: #{tpu_custom_call.1} parent=1 // pred_check_branch
      %13 = sbr.rel (0) target = $region5
    $region4: #{tpu_custom_call.1} parent=1 // pred_region
      _
    $region5: #{tpu_custom_call.1} parent=1 // pred_fallthru
      _
    // Predicated region
    $region6: #{tpu_custom_call.1} parent=1 // pred_check
      _
    $region7: #{tpu_custom_call.1} parent=1 // pred_check_branch
      %15 = sbr.rel (0) target = $region9
    $region8: #{tpu_custom_call.1} parent=1 // pred_region
      _
    $region9: #{tpu_custom_call.1} parent=1 // pred_fallthru
      _
    // Predicated region
    $region10: #{tpu_custom_call.1} parent=1 // pred_check
      _
    $region11: #{tpu_custom_call.1} parent=1 // pred_check_branch
      %17 = sbr.rel (0) target = $region13
    $region12: #{tpu_custom_call.1} parent=1 // pred_region
      %s19 = ssub.s32 8192, 8192
      %20 = vsyncadd [#allocation3], %s19
      %s21 = sshll.u32 [#allocation2], 4
      %s22 = int_to_ptr.vmem [resolvable:$true] %s21
      %27 = dma.hbm_to_vmem [thread:$0]  %s2, 8192, %s22, [#allocation3], 512, 512, 32
    $region13: #{tpu_custom_call.1} parent=1 // pred_fallthru
      _
    // Predicated region
    $region14: #{tpu_custom_call.1} parent=1 // pred_check
      _
    $region15: #{tpu_custom_call.1} parent=1 // pred_check_branch
      %29 = sbr.rel (0) target = $region17
    $region16: #{tpu_custom_call.1} parent=1 // pred_region
      _
    $region17: #{tpu_custom_call.1} parent=1 // pred_fallthru
      _
    // Predicated region
    $region18: #{tpu_custom_call.1} parent=1 // pred_check
      _
    $region19: #{tpu_custom_call.1} parent=1 // pred_check_branch
      %31 = sbr.rel (0) target = $region21
    $region20: #{tpu_custom_call.1} parent=1 // pred_region
      _
    $region21: #{tpu_custom_call.1} parent=1 // pred_fallthru
      _
    // Predicated region
    $region22: #{tpu_custom_call.1} parent=1 // pred_check
      _
    $region23: #{tpu_custom_call.1} parent=1 // pred_check_branch
      %33 = sbr.rel (0) target = $region25
    $region24: #{tpu_custom_call.1} parent=1 // pred_region
      _
    $region25: #{tpu_custom_call.1} parent=1 // pred_fallthru
      _
    // Predicated region
    $region26: #{tpu_custom_call.1} parent=1 // pred_check
      _
    $region27: #{tpu_custom_call.1} parent=1 // pred_check_branch
      %35 = sbr.rel (0) target = $region29
    $region28: #{tpu_custom_call.1} parent=1 // pred_region
      %36 = dma.done [#allocation3], 8192
    $region29: #{tpu_custom_call.1} parent=1 // pred_fallthru
      _
    %v37 = vld [vmem:[%s0] sm:$0xff]
    %v38 = vld [vmem:[%s1] sm:$0xff]
    %v39 = vld [vmem:[%s1 + $0x8] sm:$0xff]
    %v40 = vld [vmem:[%s1 + $0x10] sm:$0xff]
    %v41 = vld [vmem:[%s1 + $0x18] sm:$0xff]
    %v42 = vld [vmem:[%s1 + $0x20] sm:$0x3f]
    %v43 = vld [vmem:[%s1 + $0x28] sm:$0x3f]
    %v44 = vld [vmem:[%s1 + $0x30] sm:$0x3f]
    %v45 = vld [vmem:[%s1 + $0x38] sm:$0x3f]
    %v46 = vld [vmem:[%s3] sm:$0xf]
    %v48 = vlaneseq
    %v49 = vshrl.u32 %v48, 7
    %v50 = vsub.s32 0, %v49
    %v51 = vrot.slane %v46, %v50
    %v52 = vlaneseq
    %v53 = vshrl.u32 %v52, 7
    %v54 = vsub.s32 1, %v53
    %v55 = vrot.slane %v46, %v54
    %v56 = vlaneseq
    %v57 = vshrl.u32 %v56, 7
    %v58 = vsub.s32 2, %v57
    %v59 = vrot.slane %v46, %v58
    %v60 = vlaneseq
    %v61 = vshrl.u32 %v60, 7
    %v62 = vsub.s32 3, %v61
    %v63 = vrot.slane %v46, %v62
    %vm68 = vcmask 113664
    %v70 = vsel %vm68, %v37, 0
    %vm72 = vcmask 1045504
    %v74 = vsel %vm72, %v42, 0
    %v77 = vsel %vm72, %v43, 0
    %v80 = vsel %vm72, %v44, 0
    %v83 = vsel %vm72, %v45, 0
    %85 = vmatprep.subr.mxu0 %v39
    %86 = vmatpush1.msra.mxu0 %v38
    %87 = vmatprep.subr.mxu0 %v77
    %88 = vmatpush1.msra.mxu0 %v74
    %89 = vmatprep.subr.mxu0 0.0
    %90 = vmatpush1.msra.mxu0 0.0
    %91 = vmatprep.subr.mxu0 0.0
    %92 = vmatpush1.msra.mxu0 0.0
    %93 = vmatprep.subr.mxu0 0.0
    %94 = vmatpush1.msra.mxu0 0.0
    %95 = vmatprep.subr.mxu0 0.0
    %96 = vmatpush1.msra.mxu0 0.0
    %97 = vmatprep.subr.mxu0 0.0
    %98 = vmatpush1.msra.mxu0 0.0
    %99 = vmatprep.subr.mxu0 0.0
    %100 = vmatpush1.msra.mxu0 0.0
    %101 = vmatprep.subr.mxu0 0.0
    %102 = vmatpush1.msra.mxu0 0.0
    %103 = vmatprep.subr.mxu0 0.0
    %104 = vmatpush1.msra.mxu0 0.0
    %105 = vmatprep.subr.mxu0 0.0
    %106 = vmatpush1.msra.mxu0 0.0
    %107 = vmatprep.subr.mxu0 0.0
    %108 = vmatpush1.msra.mxu0 0.0
    %109 = vmatprep.subr.mxu0 0.0
    %110 = vmatpush1.msra.mxu0 0.0
    %111 = vmatprep.subr.mxu0 0.0
    %112 = vmatpush1.msra.mxu0 0.0
    %113 = vmatprep.subr.mxu0 0.0
    %114 = vmatpush1.msra.mxu0 0.0
    %115 = vmatprep.subr.mxu0 0.0
    %116 = vmatpush1.msra.mxu0 0.0
    %117 = vmatprep.subr.mxu0 0.0
    %118 = vmatpush1.msra.mxu0 0.0
    %119 = vmatprep.subr.mxu0 0.0
    %120 = vmatpush1.msra.mxu0 0.0
    %121 = vmatprep.subr.mxu0 0.0
    %122 = vmatpush1.msra.mxu0 0.0
    %123 = vmatprep.subr.mxu0 0.0
    %124 = vmatpush1.msra.mxu0 0.0
    %125 = vmatprep.subr.mxu0 0.0
    %126 = vmatpush1.msra.mxu0 0.0
    %127 = vmatprep.subr.mxu0 0.0
    %128 = vmatpush1.msra.mxu0 0.0
    %129 = vmatprep.subr.mxu0 0.0
    %130 = vmatpush1.msra.mxu0 0.0
    %131 = vmatprep.subr.mxu0 0.0
    %132 = vmatpush1.msra.mxu0 0.0
    %133 = vmatprep.subr.mxu0 0.0
    %134 = vmatpush1.msra.mxu0 0.0
    %135 = vmatprep.subr.mxu0 0.0
    %136 = vmatpush1.msra.mxu0 0.0
    %137 = vmatprep.subr.mxu0 0.0
    %138 = vmatpush1.msra.mxu0 0.0
    %139 = vmatprep.subr.mxu0 0.0
    %140 = vmatpush1.msra.mxu0 0.0
    %141 = vmatprep.subr.mxu0 0.0
    %142 = vmatpush1.msra.mxu0 0.0
    %143 = vmatprep.subr.mxu0 0.0
    %144 = vmatpush1.msra.mxu0 0.0
    %145 = vmatprep.subr.mxu0 0.0
    %146 = vmatpush1.msra.mxu0 0.0
    %147 = vmatprep.subr.mxu0 0.0
    %148 = vmatpush1.msra.mxu0 0.0
    %149 = vmatprep.mubr.f32.mxu0 0.0
    %150 = vmatmul.mubr.f32.gmra.mrb[0].mxu0 %v70
    %v151 = vpop.f32.mrb[0].mxu0
    %v152 = vadd.f32 %v51, %v151
    %v153 = vpop.f32.mrb[0].mxu0
    %v154 = vadd.f32 %v55, %v153
    %155 = vdwg.mxu0
    %156 = vmatprep.subr.mxu0 %v41
    %157 = vmatpush1.msra.mxu0 %v40
    %158 = vmatprep.subr.mxu0 %v83
    %159 = vmatpush1.msra.mxu0 %v80
    %160 = vmatprep.subr.mxu0 0.0
    %161 = vmatpush1.msra.mxu0 0.0
    %162 = vmatprep.subr.mxu0 0.0
    %163 = vmatpush1.msra.mxu0 0.0
    %164 = vmatprep.subr.mxu0 0.0
    %165 = vmatpush1.msra.mxu0 0.0
    %166 = vmatprep.subr.mxu0 0.0
    %167 = vmatpush1.msra.mxu0 0.0
    %168 = vmatprep.subr.mxu0 0.0
    %169 = vmatpush1.msra.mxu0 0.0
    %170 = vmatprep.subr.mxu0 0.0
    %171 = vmatpush1.msra.mxu0 0.0
    %172 = vmatprep.subr.mxu0 0.0
    %173 = vmatpush1.msra.mxu0 0.0
    %174 = vmatprep.subr.mxu0 0.0
    %175 = vmatpush1.msra.mxu0 0.0
    %176 = vmatprep.subr.mxu0 0.0
    %177 = vmatpush1.msra.mxu0 0.0
    %178 = vmatprep.subr.mxu0 0.0
    %179 = vmatpush1.msra.mxu0 0.0
    %180 = vmatprep.subr.mxu0 0.0
    %181 = vmatpush1.msra.mxu0 0.0
    %182 = vmatprep.subr.mxu0 0.0
    %183 = vmatpush1.msra.mxu0 0.0
    %184 = vmatprep.subr.mxu0 0.0
    %185 = vmatpush1.msra.mxu0 0.0
    %186 = vmatprep.subr.mxu0 0.0
    %187 = vmatpush1.msra.mxu0 0.0
    %188 = vmatprep.subr.mxu0 0.0
    %189 = vmatpush1.msra.mxu0 0.0
    %190 = vmatprep.subr.mxu0 0.0
    %191 = vmatpush1.msra.mxu0 0.0
    %192 = vmatprep.subr.mxu0 0.0
    %193 = vmatpush1.msra.mxu0 0.0
    %194 = vmatprep.subr.mxu0 0.0
    %195 = vmatpush1.msra.mxu0 0.0
    %196 = vmatprep.subr.mxu0 0.0
    %197 = vmatpush1.msra.mxu0 0.0
    %198 = vmatprep.subr.mxu0 0.0
    %199 = vmatpush1.msra.mxu0 0.0
    %200 = vmatprep.subr.mxu0 0.0
    %201 = vmatpush1.msra.mxu0 0.0
    %202 = vmatprep.subr.mxu0 0.0
    %203 = vmatpush1.msra.mxu0 0.0
    %204 = vmatprep.subr.mxu0 0.0
    %205 = vmatpush1.msra.mxu0 0.0
    %206 = vmatprep.subr.mxu0 0.0
    %207 = vmatpush1.msra.mxu0 0.0
    %208 = vmatprep.subr.mxu0 0.0
    %209 = vmatpush1.msra.mxu0 0.0
    %210 = vmatprep.subr.mxu0 0.0
    %211 = vmatpush1.msra.mxu0 0.0
    %212 = vmatprep.subr.mxu0 0.0
    %213 = vmatpush1.msra.mxu0 0.0
    %214 = vmatprep.subr.mxu0 0.0
    %215 = vmatpush1.msra.mxu0 0.0
    %216 = vmatprep.subr.mxu0 0.0
    %217 = vmatpush1.msra.mxu0 0.0
    %218 = vmatprep.subr.mxu0 0.0
    %219 = vmatpush1.msra.mxu0 0.0
    %220 = vmatprep.mubr.f32.mxu0 0.0
    %221 = vmatmul.mubr.f32.gmra.mrb[0].mxu0 %v70
    %v222 = vpop.f32.mrb[0].mxu0
    %v223 = vadd.f32 %v59, %v222
    %v224 = vpop.f32.mrb[0].mxu0
    %v225 = vadd.f32 %v63, %v224
    %226 = vdwg.mxu0
    %v227 = vld [vmem:[#allocation2] sm:$0xff]
    %v228 = vld [vmem:[#allocation2 + $0x8] sm:$0xff]
    %v229 = vld [vmem:[#allocation2 + $0x10] sm:$0xff]
    %v230 = vld [vmem:[#allocation2 + $0x18] sm:$0xff]
    %v231 = vld [vmem:[#allocation2 + $0x20] sm:$0xff]
    %v232 = vld [vmem:[#allocation2 + $0x28] sm:$0xff]
    %v233 = vld [vmem:[#allocation2 + $0x30] sm:$0xff]
    %v234 = vld [vmem:[#allocation2 + $0x38] sm:$0xff]
    %v235 = vld [vmem:[#allocation2 + $0x40] sm:$0xff]
    %v236 = vld [vmem:[#allocation2 + $0x48] sm:$0xff]
    %v237 = vld [vmem:[#allocation2 + $0x50] sm:$0xff]
    %v238 = vld [vmem:[#allocation2 + $0x58] sm:$0xff]
    %v239 = vld [vmem:[#allocation2 + $0x60] sm:$0xff]
    %v240 = vld [vmem:[#allocation2 + $0x68] sm:$0xff]
    %v241 = vld [vmem:[#allocation2 + $0x70] sm:$0xff]
    %v242 = vld [vmem:[#allocation2 + $0x78] sm:$0xff]
    %v243 = vld [vmem:[#allocation2 + $0x80] sm:$0xff]
    %v244 = vld [vmem:[#allocation2 + $0x88] sm:$0xff]
    %v245 = vld [vmem:[#allocation2 + $0x90] sm:$0xff]
    %v246 = vld [vmem:[#allocation2 + $0x98] sm:$0xff]
    %v247 = vld [vmem:[#allocation2 + $0xa0] sm:$0xff]
    %v248 = vld [vmem:[#allocation2 + $0xa8] sm:$0xff]
    %v249 = vld [vmem:[#allocation2 + $0xb0] sm:$0xff]
    %v250 = vld [vmem:[#allocation2 + $0xb8] sm:$0xff]
    %v251 = vld [vmem:[#allocation2 + $0xc0] sm:$0xff]
    %v252 = vld [vmem:[#allocation2 + $0xc8] sm:$0xff]
    %v253 = vld [vmem:[#allocation2 + $0xd0] sm:$0xff]
    %v254 = vld [vmem:[#allocation2 + $0xd8] sm:$0xff]
    %v255 = vld [vmem:[#allocation2 + $0xe0] sm:$0xff]
    %v256 = vld [vmem:[#allocation2 + $0xe8] sm:$0xff]
    %v257 = vld [vmem:[#allocation2 + $0xf0] sm:$0xff]
    %v258 = vld [vmem:[#allocation2 + $0xf8] sm:$0xff]
    %v259 = vld [vmem:[#allocation2 + $0x100] sm:$0xff]
    %v260 = vld [vmem:[#allocation2 + $0x108] sm:$0xff]
    %v261 = vld [vmem:[#allocation2 + $0x110] sm:$0xff]
    %v262 = vld [vmem:[#allocation2 + $0x118] sm:$0xff]
    %v263 = vld [vmem:[#allocation2 + $0x120] sm:$0xff]
    %v264 = vld [vmem:[#allocation2 + $0x128] sm:$0xff]
    %v265 = vld [vmem:[#allocation2 + $0x130] sm:$0xff]
    %v266 = vld [vmem:[#allocation2 + $0x138] sm:$0xff]
    %v267 = vld [vmem:[#allocation2 + $0x140] sm:$0xff]
    %v268 = vld [vmem:[#allocation2 + $0x148] sm:$0xff]
    %v269 = vld [vmem:[#allocation2 + $0x150] sm:$0xff]
    %v270 = vld [vmem:[#allocation2 + $0x158] sm:$0xff]
    %v271 = vld [vmem:[#allocation2 + $0x160] sm:$0xff]
    %v272 = vld [vmem:[#allocation2 + $0x168] sm:$0xff]
    %v273 = vld [vmem:[#allocation2 + $0x170] sm:$0xff]
    %v274 = vld [vmem:[#allocation2 + $0x178] sm:$0xff]
    %v275 = vld [vmem:[#allocation2 + $0x180] sm:$0xff]
    %v276 = vld [vmem:[#allocation2 + $0x188] sm:$0xff]
    %v277 = vld [vmem:[#allocation2 + $0x190] sm:$0xff]
    %v278 = vld [vmem:[#allocation2 + $0x198] sm:$0xff]
    %v279 = vld [vmem:[#allocation2 + $0x1a0] sm:$0xff]
    %v280 = vld [vmem:[#allocation2 + $0x1a8] sm:$0xff]
    %v281 = vld [vmem:[#allocation2 + $0x1b0] sm:$0xff]
    %v282 = vld [vmem:[#allocation2 + $0x1b8] sm:$0xff]
    %v283 = vld [vmem:[#allocation2 + $0x1c0] sm:$0xff]
    %v284 = vld [vmem:[#allocation2 + $0x1c8] sm:$0xff]
    %v285 = vld [vmem:[#allocation2 + $0x1d0] sm:$0xff]
    %v286 = vld [vmem:[#allocation2 + $0x1d8] sm:$0xff]
    %v287 = vld [vmem:[#allocation2 + $0x1e0] sm:$0xff]
    %v288 = vld [vmem:[#allocation2 + $0x1e8] sm:$0xff]
    %v289 = vld [vmem:[#allocation2 + $0x1f0] sm:$0xff]
    %v290 = vld [vmem:[#allocation2 + $0x1f8] sm:$0xff]
    %291 = vmatprep.subr.mxu0 %v228
    %292 = vmatpush1.msra.mxu0 %v227
    %293 = vmatprep.subr.mxu0 %v232
    %294 = vmatpush1.msra.mxu0 %v231
    %295 = vmatprep.subr.mxu0 %v236
    %296 = vmatpush1.msra.mxu0 %v235
    %297 = vmatprep.subr.mxu0 %v240
    %298 = vmatpush1.msra.mxu0 %v239
    %299 = vmatprep.subr.mxu0 %v244
    %300 = vmatpush1.msra.mxu0 %v243
    %301 = vmatprep.subr.mxu0 %v248
    %302 = vmatpush1.msra.mxu0 %v247
    %303 = vmatprep.subr.mxu0 %v252
    %304 = vmatpush1.msra.mxu0 %v251
    %305 = vmatprep.subr.mxu0 %v256
    %306 = vmatpush1.msra.mxu0 %v255
    %307 = vmatprep.subr.mxu0 %v260
    %308 = vmatpush1.msra.mxu0 %v259
    %309 = vmatprep.subr.mxu0 %v264
    %310 = vmatpush1.msra.mxu0 %v263
    %311 = vmatprep.subr.mxu0 %v268
    %312 = vmatpush1.msra.mxu0 %v267
    %313 = vmatprep.subr.mxu0 %v272
    %314 = vmatpush1.msra.mxu0 %v271
    %315 = vmatprep.subr.mxu0 %v276
    %316 = vmatpush1.msra.mxu0 %v275
    %317 = vmatprep.subr.mxu0 %v280
    %318 = vmatpush1.msra.mxu0 %v279
    %319 = vmatprep.subr.mxu0 %v284
    %320 = vmatpush1.msra.mxu0 %v283
    %321 = vmatprep.subr.mxu0 %v288
    %322 = vmatpush1.msra.mxu0 %v287
    %323 = vmatprep.subr.mxu0 0.0
    %324 = vmatpush1.msra.mxu0 0.0
    %325 = vmatprep.subr.mxu0 0.0
    %326 = vmatpush1.msra.mxu0 0.0
    %327 = vmatprep.subr.mxu0 0.0
    %328 = vmatpush1.msra.mxu0 0.0
    %329 = vmatprep.subr.mxu0 0.0
    %330 = vmatpush1.msra.mxu0 0.0
    %331 = vmatprep.subr.mxu0 0.0
    %332 = vmatpush1.msra.mxu0 0.0
    %333 = vmatprep.subr.mxu0 0.0
    %334 = vmatpush1.msra.mxu0 0.0
    %335 = vmatprep.subr.mxu0 0.0
    %336 = vmatpush1.msra.mxu0 0.0
    %337 = vmatprep.subr.mxu0 0.0
    %338 = vmatpush1.msra.mxu0 0.0
    %339 = vmatprep.subr.mxu0 0.0
    %340 = vmatpush1.msra.mxu0 0.0
    %341 = vmatprep.subr.mxu0 0.0
    %342 = vmatpush1.msra.mxu0 0.0
    %343 = vmatprep.subr.mxu0 0.0
    %344 = vmatpush1.msra.mxu0 0.0
    %345 = vmatprep.subr.mxu0 0.0
    %346 = vmatpush1.msra.mxu0 0.0
    %347 = vmatprep.subr.mxu0 0.0
    %348 = vmatpush1.msra.mxu0 0.0
    %349 = vmatprep.subr.mxu0 0.0
    %350 = vmatpush1.msra.mxu0 0.0
    %351 = vmatprep.subr.mxu0 0.0
    %352 = vmatpush1.msra.mxu0 0.0
    %353 = vmatprep.subr.mxu0 0.0
    %354 = vmatpush1.msra.mxu0 0.0
    %355 = vmatprep.mubr.f32.mxu0 0.0
    %356 = vmatmul.mubr.f32.gmra.mrb[0].mxu0 0.0
    %v357 = vpop.f32.mrb[0].mxu0
    %v358 = vadd.f32 0.0, %v357
    %v359 = vpop.f32.mrb[0].mxu0
    %v360 = vadd.f32 0.0, %v359
    %361 = vdwg.mxu0
    %362 = vmatprep.subr.mxu0 %v230
    %363 = vmatpush1.msra.mxu0 %v229
    %364 = vmatprep.subr.mxu0 %v234
    %365 = vmatpush1.msra.mxu0 %v233
    %366 = vmatprep.subr.mxu0 %v238
    %367 = vmatpush1.msra.mxu0 %v237
    %368 = vmatprep.subr.mxu0 %v242
    %369 = vmatpush1.msra.mxu0 %v241
    %370 = vmatprep.subr.mxu0 %v246
    %371 = vmatpush1.msra.mxu0 %v245
    %372 = vmatprep.subr.mxu0 %v250
    %373 = vmatpush1.msra.mxu0 %v249
    %374 = vmatprep.subr.mxu0 %v254
    %375 = vmatpush1.msra.mxu0 %v253
    %376 = vmatprep.subr.mxu0 %v258
    %377 = vmatpush1.msra.mxu0 %v257
    %378 = vmatprep.subr.mxu0 %v262
    %379 = vmatpush1.msra.mxu0 %v261
    %380 = vmatprep.subr.mxu0 %v266
    %381 = vmatpush1.msra.mxu0 %v265
    %382 = vmatprep.subr.mxu0 %v270
    %383 = vmatpush1.msra.mxu0 %v269
    %384 = vmatprep.subr.mxu0 %v274
    %385 = vmatpush1.msra.mxu0 %v273
    %386 = vmatprep.subr.mxu0 %v278
    %387 = vmatpush1.msra.mxu0 %v277
    %388 = vmatprep.subr.mxu0 %v282
    %389 = vmatpush1.msra.mxu0 %v281
    %390 = vmatprep.subr.mxu0 %v286
    %391 = vmatpush1.msra.mxu0 %v285
    %392 = vmatprep.subr.mxu0 %v290
    %393 = vmatpush1.msra.mxu0 %v289
    %394 = vmatprep.subr.mxu0 0.0
    %395 = vmatpush1.msra.mxu0 0.0
    %396 = vmatprep.subr.mxu0 0.0
    %397 = vmatpush1.msra.mxu0 0.0
    %398 = vmatprep.subr.mxu0 0.0
    %399 = vmatpush1.msra.mxu0 0.0
    %400 = vmatprep.subr.mxu0 0.0
    %401 = vmatpush1.msra.mxu0 0.0
    %402 = vmatprep.subr.mxu0 0.0
    %403 = vmatpush1.msra.mxu0 0.0
    %404 = vmatprep.subr.mxu0 0.0
    %405 = vmatpush1.msra.mxu0 0.0
    %406 = vmatprep.subr.mxu0 0.0
    %407 = vmatpush1.msra.mxu0 0.0
    %408 = vmatprep.subr.mxu0 0.0
    %409 = vmatpush1.msra.mxu0 0.0
    %410 = vmatprep.subr.mxu0 0.0
    %411 = vmatpush1.msra.mxu0 0.0
    %412 = vmatprep.subr.mxu0 0.0
    %413 = vmatpush1.msra.mxu0 0.0
    %414 = vmatprep.subr.mxu0 0.0
    %415 = vmatpush1.msra.mxu0 0.0
    %416 = vmatprep.subr.mxu0 0.0
    %417 = vmatpush1.msra.mxu0 0.0
    %418 = vmatprep.subr.mxu0 0.0
    %419 = vmatpush1.msra.mxu0 0.0
    %420 = vmatprep.subr.mxu0 0.0
    %421 = vmatpush1.msra.mxu0 0.0
    %422 = vmatprep.subr.mxu0 0.0
    %423 = vmatpush1.msra.mxu0 0.0
    %424 = vmatprep.subr.mxu0 0.0
    %425 = vmatpush1.msra.mxu0 0.0
    %426 = vmatprep.mubr.f32.mxu0 0.0
    %427 = vmatmul.mubr.f32.gmra.mrb[0].mxu0 0.0
    %v428 = vpop.f32.mrb[0].mxu0
    %v429 = vadd.f32 0.0, %v428
    %v430 = vpop.f32.mrb[0].mxu0
    %v431 = vadd.f32 0.0, %v430
    %432 = vdwg.mxu0
    %v433 = vadd.f32 %v152, %v358
    %v434 = vadd.f32 %v154, %v360
    %v435 = vadd.f32 %v223, %v429
    %v436 = vadd.f32 %v225, %v431
    %v437 = vmul.f32 %v433, 0.5
    %v438 = vmul.f32 %v434, 0.5
    %v439 = vmul.f32 %v435, 0.5
    %v440 = vtanh.pop %v437
    %v441 = vtanh.pop %v438
    %v442 = vtanh.pop %v439
    %v443 = vmul.f32 %v440, 0.5
    %v444 = vmul.f32 %v441, 0.5
    %v445 = vmul.f32 %v442, 0.5
    %v446 = vadd.f32 %v443, 0.5
    %v447 = vadd.f32 %v444, 0.5
    %v448 = vadd.f32 %v445, 0.5
    %v449 = vtanh.pop %v436
    %v450 = vmul.f32 %v447, 0.0
    %v451 = vmul.f32 %v446, %v449
    %v452 = vadd.f32 %v450, %v451
    %v453 = vtanh.pop %v452
    %v454 = vmul.f32 %v448, %v453
    %455 = vmatprep.subr.mxu0 %v228
    %456 = vmatpush1.msra.mxu0 %v227
    %457 = vmatprep.subr.mxu0 %v232
    %458 = vmatpush1.msra.mxu0 %v231
    %459 = vmatprep.subr.mxu0 %v236
    %460 = vmatpush1.msra.mxu0 %v235
    %461 = vmatprep.subr.mxu0 %v240
    %462 = vmatpush1.msra.mxu0 %v239
    %463 = vmatprep.subr.mxu0 %v244
    %464 = vmatpush1.msra.mxu0 %v243
    %465 = vmatprep.subr.mxu0 %v248
    %466 = vmatpush1.msra.mxu0 %v247
    %467 = vmatprep.subr.mxu0 %v252
    %468 = vmatpush1.msra.mxu0 %v251
    %469 = vmatprep.subr.mxu0 %v256
    %470 = vmatpush1.msra.mxu0 %v255
    %471 = vmatprep.subr.mxu0 %v260
    %472 = vmatpush1.msra.mxu0 %v259
    %473 = vmatprep.subr.mxu0 %v264
    %474 = vmatpush1.msra.mxu0 %v263
    %475 = vmatprep.subr.mxu0 %v268
    %476 = vmatpush1.msra.mxu0 %v267
    %477 = vmatprep.subr.mxu0 %v272
    %478 = vmatpush1.msra.mxu0 %v271
    %479 = vmatprep.subr.mxu0 %v276
    %480 = vmatpush1.msra.mxu0 %v275
    %481 = vmatprep.subr.mxu0 %v280
    %482 = vmatpush1.msra.mxu0 %v279
    %483 = vmatprep.subr.mxu0 %v284
    %484 = vmatpush1.msra.mxu0 %v283
    %485 = vmatprep.subr.mxu0 %v288
    %486 = vmatpush1.msra.mxu0 %v287
    %487 = vmatprep.subr.mxu0 0.0
    %488 = vmatpush1.msra.mxu0 0.0
    %489 = vmatprep.subr.mxu0 0.0
    %490 = vmatpush1.msra.mxu0 0.0
    %491 = vmatprep.subr.mxu0 0.0
    %492 = vmatpush1.msra.mxu0 0.0
    %493 = vmatprep.subr.mxu0 0.0
    %494 = vmatpush1.msra.mxu0 0.0
    %495 = vmatprep.subr.mxu0 0.0
    %496 = vmatpush1.msra.mxu0 0.0
    %497 = vmatprep.subr.mxu0 0.0
    %498 = vmatpush1.msra.mxu0 0.0
    %499 = vmatprep.subr.mxu0 0.0
    %500 = vmatpush1.msra.mxu0 0.0
    %501 = vmatprep.subr.mxu0 0.0
    %502 = vmatpush1.msra.mxu0 0.0
    %503 = vmatprep.subr.mxu0 0.0
    %504 = vmatpush1.msra.mxu0 0.0
    %505 = vmatprep.subr.mxu0 0.0
    %506 = vmatpush1.msra.mxu0 0.0
    %507 = vmatprep.subr.mxu0 0.0
    %508 = vmatpush1.msra.mxu0 0.0
    %509 = vmatprep.subr.mxu0 0.0
    %510 = vmatpush1.msra.mxu0 0.0
    %511 = vmatprep.subr.mxu0 0.0
    %512 = vmatpush1.msra.mxu0 0.0
    %513 = vmatprep.subr.mxu0 0.0
    %514 = vmatpush1.msra.mxu0 0.0
    %515 = vmatprep.subr.mxu0 0.0
    %516 = vmatpush1.msra.mxu0 0.0
    %517 = vmatprep.subr.mxu0 0.0
    %518 = vmatpush1.msra.mxu0 0.0
    %519 = vmatprep.mubr.f32.mxu0 0.0
    %520 = vmatmul.mubr.f32.gmra.mrb[0].mxu0 %v454
    %v521 = vpop.f32.mrb[0].mxu0
    %v522 = vadd.f32 0.0, %v521
    %v523 = vpop.f32.mrb[0].mxu0
    %v524 = vadd.f32 0.0, %v523
    %525 = vdwg.mxu0
    %526 = vmatprep.subr.mxu0 %v230
    %527 = vmatpush1.msra.mxu0 %v229
    %528 = vmatprep.subr.mxu0 %v234
    %529 = vmatpush1.msra.mxu0 %v233
    %530 = vmatprep.subr.mxu0 %v238
    %531 = vmatpush1.msra.mxu0 %v237
    %532 = vmatprep.subr.mxu0 %v242
    %533 = vmatpush1.msra.mxu0 %v241
    %534 = vmatprep.subr.mxu0 %v246
    %535 = vmatpush1.msra.mxu0 %v245
    %536 = vmatprep.subr.mxu0 %v250
    %537 = vmatpush1.msra.mxu0 %v249
    %538 = vmatprep.subr.mxu0 %v254
    %539 = vmatpush1.msra.mxu0 %v253
    %540 = vmatprep.subr.mxu0 %v258
    %541 = vmatpush1.msra.mxu0 %v257
    %542 = vmatprep.subr.mxu0 %v262
    %543 = vmatpush1.msra.mxu0 %v261
    %544 = vmatprep.subr.mxu0 %v266
    %545 = vmatpush1.msra.mxu0 %v265
    %546 = vmatprep.subr.mxu0 %v270
    %547 = vmatpush1.msra.mxu0 %v269
    %548 = vmatprep.subr.mxu0 %v274
    %549 = vmatpush1.msra.mxu0 %v273
    %550 = vmatprep.subr.mxu0 %v278
    %551 = vmatpush1.msra.mxu0 %v277
    %552 = vmatprep.subr.mxu0 %v282
    %553 = vmatpush1.msra.mxu0 %v281
    %554 = vmatprep.subr.mxu0 %v286
    %555 = vmatpush1.msra.mxu0 %v285
    %556 = vmatprep.subr.mxu0 %v290
    %557 = vmatpush1.msra.mxu0 %v289
    %558 = vmatprep.subr.mxu0 0.0
    %559 = vmatpush1.msra.mxu0 0.0
    %560 = vmatprep.subr.mxu0 0.0
    %561 = vmatpush1.msra.mxu0 0.0
    %562 = vmatprep.subr.mxu0 0.0
    %563 = vmatpush1.msra.mxu0 0.0
    %564 = vmatprep.subr.mxu0 0.0
    %565 = vmatpush1.msra.mxu0 0.0
    %566 = vmatprep.subr.mxu0 0.0
    %567 = vmatpush1.msra.mxu0 0.0
    %568 = vmatprep.subr.mxu0 0.0
    %569 = vmatpush1.msra.mxu0 0.0
    %570 = vmatprep.subr.mxu0 0.0
    %571 = vmatpush1.msra.mxu0 0.0
    %572 = vmatprep.subr.mxu0 0.0
    %573 = vmatpush1.msra.mxu0 0.0
    %574 = vmatprep.subr.mxu0 0.0
    %575 = vmatpush1.msra.mxu0 0.0
    %576 = vmatprep.subr.mxu0 0.0
    %577 = vmatpush1.msra.mxu0 0.0
    %578 = vmatprep.subr.mxu0 0.0
    %579 = vmatpush1.msra.mxu0 0.0
    %580 = vmatprep.subr.mxu0 0.0
    %581 = vmatpush1.msra.mxu0 0.0
    %582 = vmatprep.subr.mxu0 0.0
    %583 = vmatpush1.msra.mxu0 0.0
    %584 = vmatprep.subr.mxu0 0.0
    %585 = vmatpush1.msra.mxu0 0.0
    %586 = vmatprep.subr.mxu0 0.0
    %587 = vmatpush1.msra.mxu0 0.0
    %588 = vmatprep.subr.mxu0 0.0
    %589 = vmatpush1.msra.mxu0 0.0
    %590 = vmatprep.mubr.f32.mxu0 0.0
    %591 = vmatmul.mubr.f32.gmra.mrb[0].mxu0 %v454
    %v592 = vpop.f32.mrb[0].mxu0
    %v593 = vadd.f32 0.0, %v592
    %v594 = vpop.f32.mrb[0].mxu0
    %v595 = vadd.f32 0.0, %v594
    %596 = vdwg.mxu0
    %v601 = vrot.slane %v522, 7
    %v602 = vrot.slane %v524, 7
    %v603 = vrot.slane %v593, 7
    %v604 = vrot.slane %v595, 7
    %v609 = vadd.f32 %v152, %v601
    %v610 = vadd.f32 %v154, %v602
    %v611 = vadd.f32 %v223, %v603
    %v612 = vadd.f32 %v225, %v604
    %v613 = vmul.f32 %v609, 0.5
    %v614 = vmul.f32 %v610, 0.5
    %v615 = vmul.f32 %v611, 0.5
    %v616 = vtanh.pop %v613
    %v617 = vtanh.pop %v614
    %v618 = vtanh.pop %v615
    %v619 = vmul.f32 %v616, 0.5
    %v620 = vmul.f32 %v617, 0.5
    %v621 = vmul.f32 %v618, 0.5
    %v622 = vadd.f32 %v619, 0.5
    %v623 = vadd.f32 %v620, 0.5
    %v624 = vadd.f32 %v621, 0.5
    %v625 = vtanh.pop %v612
    %v627 = vrot.slane %v452, 7
    %v629 = vmul.f32 %v623, %v627
    %v630 = vmul.f32 %v622, %v625
    %v631 = vadd.f32 %v629, %v630
    %v632 = vtanh.pop %v631
    %v633 = vmul.f32 %v624, %v632
    %v635 = vrot.slane %v633, 1
    %637 = vmatprep.subr.mxu0 %v228
    %638 = vmatpush1.msra.mxu0 %v227
    %639 = vmatprep.subr.mxu0 %v232
    %640 = vmatpush1.msra.mxu0 %v231
    %641 = vmatprep.subr.mxu0 %v236
    %642 = vmatpush1.msra.mxu0 %v235
    %643 = vmatprep.subr.mxu0 %v240
    %644 = vmatpush1.msra.mxu0 %v239
    %645 = vmatprep.subr.mxu0 %v244
    %646 = vmatpush1.msra.mxu0 %v243
    %647 = vmatprep.subr.mxu0 %v248
    %648 = vmatpush1.msra.mxu0 %v247
    %649 = vmatprep.subr.mxu0 %v252
    %650 = vmatpush1.msra.mxu0 %v251
    %651 = vmatprep.subr.mxu0 %v256
    %652 = vmatpush1.msra.mxu0 %v255
    %653 = vmatprep.subr.mxu0 %v260
    %654 = vmatpush1.msra.mxu0 %v259
    %655 = vmatprep.subr.mxu0 %v264
    %656 = vmatpush1.msra.mxu0 %v263
    %657 = vmatprep.subr.mxu0 %v268
    %658 = vmatpush1.msra.mxu0 %v267
    %659 = vmatprep.subr.mxu0 %v272
    %660 = vmatpush1.msra.mxu0 %v271
    %661 = vmatprep.subr.mxu0 %v276
    %662 = vmatpush1.msra.mxu0 %v275
    %663 = vmatprep.subr.mxu0 %v280
    %664 = vmatpush1.msra.mxu0 %v279
    %665 = vmatprep.subr.mxu0 %v284
    %666 = vmatpush1.msra.mxu0 %v283
    %667 = vmatprep.subr.mxu0 %v288
    %668 = vmatpush1.msra.mxu0 %v287
    %669 = vmatprep.subr.mxu0 0.0
    %670 = vmatpush1.msra.mxu0 0.0
    %671 = vmatprep.subr.mxu0 0.0
    %672 = vmatpush1.msra.mxu0 0.0
    %673 = vmatprep.subr.mxu0 0.0
    %674 = vmatpush1.msra.mxu0 0.0
    %675 = vmatprep.subr.mxu0 0.0
    %676 = vmatpush1.msra.mxu0 0.0
    %677 = vmatprep.subr.mxu0 0.0
    %678 = vmatpush1.msra.mxu0 0.0
    %679 = vmatprep.subr.mxu0 0.0
    %680 = vmatpush1.msra.mxu0 0.0
    %681 = vmatprep.subr.mxu0 0.0
    %682 = vmatpush1.msra.mxu0 0.0
    %683 = vmatprep.subr.mxu0 0.0
    %684 = vmatpush1.msra.mxu0 0.0
    %685 = vmatprep.subr.mxu0 0.0
    %686 = vmatpush1.msra.mxu0 0.0
    %687 = vmatprep.subr.mxu0 0.0
    %688 = vmatpush1.msra.mxu0 0.0
    %689 = vmatprep.subr.mxu0 0.0
    %690 = vmatpush1.msra.mxu0 0.0
    %691 = vmatprep.subr.mxu0 0.0
    %692 = vmatpush1.msra.mxu0 0.0
    %693 = vmatprep.subr.mxu0 0.0
    %694 = vmatpush1.msra.mxu0 0.0
    %695 = vmatprep.subr.mxu0 0.0
    %696 = vmatpush1.msra.mxu0 0.0
    %697 = vmatprep.subr.mxu0 0.0
    %698 = vmatpush1.msra.mxu0 0.0
    %699 = vmatprep.subr.mxu0 0.0
    %700 = vmatpush1.msra.mxu0 0.0
    %701 = vmatprep.mubr.f32.mxu0 0.0
    %702 = vmatmul.mubr.f32.gmra.mrb[0].mxu0 %v635
    %v703 = vpop.f32.mrb[0].mxu0
    %v704 = vadd.f32 0.0, %v703
    %v705 = vpop.f32.mrb[0].mxu0
    %v706 = vadd.f32 0.0, %v705
    %707 = vdwg.mxu0
    %708 = vmatprep.subr.mxu0 %v230
    %709 = vmatpush1.msra.mxu0 %v229
    %710 = vmatprep.subr.mxu0 %v234
    %711 = vmatpush1.msra.mxu0 %v233
    %712 = vmatprep.subr.mxu0 %v238
    %713 = vmatpush1.msra.mxu0 %v237
    %714 = vmatprep.subr.mxu0 %v242
    %715 = vmatpush1.msra.mxu0 %v241
    %716 = vmatprep.subr.mxu0 %v246
    %717 = vmatpush1.msra.mxu0 %v245
    %718 = vmatprep.subr.mxu0 %v250
    %719 = vmatpush1.msra.mxu0 %v249
    %720 = vmatprep.subr.mxu0 %v254
    %721 = vmatpush1.msra.mxu0 %v253
    %722 = vmatprep.subr.mxu0 %v258
    %723 = vmatpush1.msra.mxu0 %v257
    %724 = vmatprep.subr.mxu0 %v262
    %725 = vmatpush1.msra.mxu0 %v261
    %726 = vmatprep.subr.mxu0 %v266
    %727 = vmatpush1.msra.mxu0 %v265
    %728 = vmatprep.subr.mxu0 %v270
    %729 = vmatpush1.msra.mxu0 %v269
    %730 = vmatprep.subr.mxu0 %v274
    %731 = vmatpush1.msra.mxu0 %v273
    %732 = vmatprep.subr.mxu0 %v278
    %733 = vmatpush1.msra.mxu0 %v277
    %734 = vmatprep.subr.mxu0 %v282
    %735 = vmatpush1.msra.mxu0 %v281
    %736 = vmatprep.subr.mxu0 %v286
    %737 = vmatpush1.msra.mxu0 %v285
    %738 = vmatprep.subr.mxu0 %v290
    %739 = vmatpush1.msra.mxu0 %v289
    %740 = vmatprep.subr.mxu0 0.0
    %741 = vmatpush1.msra.mxu0 0.0
    %742 = vmatprep.subr.mxu0 0.0
    %743 = vmatpush1.msra.mxu0 0.0
    %744 = vmatprep.subr.mxu0 0.0
    %745 = vmatpush1.msra.mxu0 0.0
    %746 = vmatprep.subr.mxu0 0.0
    %747 = vmatpush1.msra.mxu0 0.0
    %748 = vmatprep.subr.mxu0 0.0
    %749 = vmatpush1.msra.mxu0 0.0
    %750 = vmatprep.subr.mxu0 0.0
    %751 = vmatpush1.msra.mxu0 0.0
    %752 = vmatprep.subr.mxu0 0.0
    %753 = vmatpush1.msra.mxu0 0.0
    %754 = vmatprep.subr.mxu0 0.0
    %755 = vmatpush1.msra.mxu0 0.0
    %756 = vmatprep.subr.mxu0 0.0
    %757 = vmatpush1.msra.mxu0 0.0
    %758 = vmatprep.subr.mxu0 0.0
    %759 = vmatpush1.msra.mxu0 0.0
    %760 = vmatprep.subr.mxu0 0.0
    %761 = vmatpush1.msra.mxu0 0.0
    %762 = vmatprep.subr.mxu0 0.0
    %763 = vmatpush1.msra.mxu0 0.0
    %764 = vmatprep.subr.mxu0 0.0
    %765 = vmatpush1.msra.mxu0 0.0
    %766 = vmatprep.subr.mxu0 0.0
    %767 = vmatpush1.msra.mxu0 0.0
    %768 = vmatprep.subr.mxu0 0.0
    %769 = vmatpush1.msra.mxu0 0.0
    %770 = vmatprep.subr.mxu0 0.0
    %771 = vmatpush1.msra.mxu0 0.0
    %772 = vmatprep.mubr.f32.mxu0 0.0
    %773 = vmatmul.mubr.f32.gmra.mrb[0].mxu0 %v635
    %v774 = vpop.f32.mrb[0].mxu0
    %v775 = vadd.f32 0.0, %v774
    %v776 = vpop.f32.mrb[0].mxu0
    %v777 = vadd.f32 0.0, %v776
    %778 = vdwg.mxu0
    %v783 = vrot.slane %v704, 6
    %v784 = vrot.slane %v706, 6
    %v785 = vrot.slane %v775, 6
    %v786 = vrot.slane %v777, 6
    %v791 = vadd.f32 %v152, %v783
    %v792 = vadd.f32 %v154, %v784
    %v793 = vadd.f32 %v223, %v785
    %v794 = vadd.f32 %v225, %v786
    %v795 = vmul.f32 %v791, 0.5
    %v796 = vmul.f32 %v792, 0.5
    %v797 = vmul.f32 %v793, 0.5
    %v798 = vtanh.pop %v795
    %v799 = vtanh.pop %v796
    %v800 = vtanh.pop %v797
    %v801 = vmul.f32 %v798, 0.5
    %v802 = vmul.f32 %v799, 0.5
    %v803 = vmul.f32 %v800, 0.5
    %v804 = vadd.f32 %v801, 0.5
    %v805 = vadd.f32 %v802, 0.5
    %v806 = vadd.f32 %v803, 0.5
    %v807 = vtanh.pop %v794
    %v809 = vrot.slane %v631, 7
    %v811 = vmul.f32 %v805, %v809
    %v812 = vmul.f32 %v804, %v807
    %v813 = vadd.f32 %v811, %v812
    %v814 = vtanh.pop %v813
    %v815 = vmul.f32 %v806, %v814
    %v817 = vrot.slane %v815, 2
    %819 = vmatprep.subr.mxu0 %v228
    %820 = vmatpush1.msra.mxu0 %v227
    %821 = vmatprep.subr.mxu0 %v232
    %822 = vmatpush1.msra.mxu0 %v231
    %823 = vmatprep.subr.mxu0 %v236
    %824 = vmatpush1.msra.mxu0 %v235
    %825 = vmatprep.subr.mxu0 %v240
    %826 = vmatpush1.msra.mxu0 %v239
    %827 = vmatprep.subr.mxu0 %v244
    %828 = vmatpush1.msra.mxu0 %v243
    %829 = vmatprep.subr.mxu0 %v248
    %830 = vmatpush1.msra.mxu0 %v247
    %831 = vmatprep.subr.mxu0 %v252
    %832 = vmatpush1.msra.mxu0 %v251
    %833 = vmatprep.subr.mxu0 %v256
    %834 = vmatpush1.msra.mxu0 %v255
    %835 = vmatprep.subr.mxu0 %v260
    %836 = vmatpush1.msra.mxu0 %v259
    %837 = vmatprep.subr.mxu0 %v264
    %838 = vmatpush1.msra.mxu0 %v263
    %839 = vmatprep.subr.mxu0 %v268
    %840 = vmatpush1.msra.mxu0 %v267
    %841 = vmatprep.subr.mxu0 %v272
    %842 = vmatpush1.msra.mxu0 %v271
    %843 = vmatprep.subr.mxu0 %v276
    %844 = vmatpush1.msra.mxu0 %v275
    %845 = vmatprep.subr.mxu0 %v280
    %846 = vmatpush1.msra.mxu0 %v279
    %847 = vmatprep.subr.mxu0 %v284
    %848 = vmatpush1.msra.mxu0 %v283
    %849 = vmatprep.subr.mxu0 %v288
    %850 = vmatpush1.msra.mxu0 %v287
    %851 = vmatprep.subr.mxu0 0.0
    %852 = vmatpush1.msra.mxu0 0.0
    %853 = vmatprep.subr.mxu0 0.0
    %854 = vmatpush1.msra.mxu0 0.0
    %855 = vmatprep.subr.mxu0 0.0
    %856 = vmatpush1.msra.mxu0 0.0
    %857 = vmatprep.subr.mxu0 0.0
    %858 = vmatpush1.msra.mxu0 0.0
    %859 = vmatprep.subr.mxu0 0.0
    %860 = vmatpush1.msra.mxu0 0.0
    %861 = vmatprep.subr.mxu0 0.0
    %862 = vmatpush1.msra.mxu0 0.0
    %863 = vmatprep.subr.mxu0 0.0
    %864 = vmatpush1.msra.mxu0 0.0
    %865 = vmatprep.subr.mxu0 0.0
    %866 = vmatpush1.msra.mxu0 0.0
    %867 = vmatprep.subr.mxu0 0.0
    %868 = vmatpush1.msra.mxu0 0.0
    %869 = vmatprep.subr.mxu0 0.0
    %870 = vmatpush1.msra.mxu0 0.0
    %871 = vmatprep.subr.mxu0 0.0
    %872 = vmatpush1.msra.mxu0 0.0
    %873 = vmatprep.subr.mxu0 0.0
    %874 = vmatpush1.msra.mxu0 0.0
    %875 = vmatprep.subr.mxu0 0.0
    %876 = vmatpush1.msra.mxu0 0.0
    %877 = vmatprep.subr.mxu0 0.0
    %878 = vmatpush1.msra.mxu0 0.0
    %879 = vmatprep.subr.mxu0 0.0
    %880 = vmatpush1.msra.mxu0 0.0
    %881 = vmatprep.subr.mxu0 0.0
    %882 = vmatpush1.msra.mxu0 0.0
    %883 = vmatprep.mubr.f32.mxu0 0.0
    %884 = vmatmul.mubr.f32.gmra.mrb[0].mxu0 %v817
    %v885 = vpop.f32.mrb[0].mxu0
    %v886 = vadd.f32 0.0, %v885
    %v887 = vpop.f32.mrb[0].mxu0
    %v888 = vadd.f32 0.0, %v887
    %889 = vdwg.mxu0
    %890 = vmatprep.subr.mxu0 %v230
    %891 = vmatpush1.msra.mxu0 %v229
    %892 = vmatprep.subr.mxu0 %v234
    %893 = vmatpush1.msra.mxu0 %v233
    %894 = vmatprep.subr.mxu0 %v238
    %895 = vmatpush1.msra.mxu0 %v237
    %896 = vmatprep.subr.mxu0 %v242
    %897 = vmatpush1.msra.mxu0 %v241
    %898 = vmatprep.subr.mxu0 %v246
    %899 = vmatpush1.msra.mxu0 %v245
    %900 = vmatprep.subr.mxu0 %v250
    %901 = vmatpush1.msra.mxu0 %v249
    %902 = vmatprep.subr.mxu0 %v254
    %903 = vmatpush1.msra.mxu0 %v253
    %904 = vmatprep.subr.mxu0 %v258
    %905 = vmatpush1.msra.mxu0 %v257
    %906 = vmatprep.subr.mxu0 %v262
    %907 = vmatpush1.msra.mxu0 %v261
    %908 = vmatprep.subr.mxu0 %v266
    %909 = vmatpush1.msra.mxu0 %v265
    %910 = vmatprep.subr.mxu0 %v270
    %911 = vmatpush1.msra.mxu0 %v269
    %912 = vmatprep.subr.mxu0 %v274
    %913 = vmatpush1.msra.mxu0 %v273
    %914 = vmatprep.subr.mxu0 %v278
    %915 = vmatpush1.msra.mxu0 %v277
    %916 = vmatprep.subr.mxu0 %v282
    %917 = vmatpush1.msra.mxu0 %v281
    %918 = vmatprep.subr.mxu0 %v286
    %919 = vmatpush1.msra.mxu0 %v285
    %920 = vmatprep.subr.mxu0 %v290
    %921 = vmatpush1.msra.mxu0 %v289
    %922 = vmatprep.subr.mxu0 0.0
    %923 = vmatpush1.msra.mxu0 0.0
    %924 = vmatprep.subr.mxu0 0.0
    %925 = vmatpush1.msra.mxu0 0.0
    %926 = vmatprep.subr.mxu0 0.0
    %927 = vmatpush1.msra.mxu0 0.0
    %928 = vmatprep.subr.mxu0 0.0
    %929 = vmatpush1.msra.mxu0 0.0
    %930 = vmatprep.subr.mxu0 0.0
    %931 = vmatpush1.msra.mxu0 0.0
    %932 = vmatprep.subr.mxu0 0.0
    %933 = vmatpush1.msra.mxu0 0.0
    %934 = vmatprep.subr.mxu0 0.0
    %935 = vmatpush1.msra.mxu0 0.0
    %936 = vmatprep.subr.mxu0 0.0
    %937 = vmatpush1.msra.mxu0 0.0
    %938 = vmatprep.subr.mxu0 0.0
    %939 = vmatpush1.msra.mxu0 0.0
    %940 = vmatprep.subr.mxu0 0.0
    %941 = vmatpush1.msra.mxu0 0.0
    %942 = vmatprep.subr.mxu0 0.0
    %943 = vmatpush1.msra.mxu0 0.0
    %944 = vmatprep.subr.mxu0 0.0
    %945 = vmatpush1.msra.mxu0 0.0
    %946 = vmatprep.subr.mxu0 0.0
    %947 = vmatpush1.msra.mxu0 0.0
    %948 = vmatprep.subr.mxu0 0.0
    %949 = vmatpush1.msra.mxu0 0.0
    %950 = vmatprep.subr.mxu0 0.0
    %951 = vmatpush1.msra.mxu0 0.0
    %952 = vmatprep.subr.mxu0 0.0
    %953 = vmatpush1.msra.mxu0 0.0
    %954 = vmatprep.mubr.f32.mxu0 0.0
    %955 = vmatmul.mubr.f32.gmra.mrb[0].mxu0 %v817
    %v956 = vpop.f32.mrb[0].mxu0
    %v957 = vadd.f32 0.0, %v956
    %v958 = vpop.f32.mrb[0].mxu0
    %v959 = vadd.f32 0.0, %v958
    %960 = vdwg.mxu0
    %v965 = vrot.slane %v886, 5
    %v966 = vrot.slane %v888, 5
    %v967 = vrot.slane %v957, 5
    %v968 = vrot.slane %v959, 5
    %v973 = vadd.f32 %v152, %v965
    %v974 = vadd.f32 %v154, %v966
    %v975 = vadd.f32 %v223, %v967
    %v976 = vadd.f32 %v225, %v968
    %v977 = vmul.f32 %v973, 0.5
    %v978 = vmul.f32 %v974, 0.5
    %v979 = vmul.f32 %v975, 0.5
    %v980 = vtanh.pop %v977
    %v981 = vtanh.pop %v978
    %v982 = vtanh.pop %v979
    %v983 = vmul.f32 %v980, 0.5
    %v984 = vmul.f32 %v981, 0.5
    %v985 = vmul.f32 %v982, 0.5
    %v986 = vadd.f32 %v983, 0.5
    %v987 = vadd.f32 %v984, 0.5
    %v988 = vadd.f32 %v985, 0.5
    %v989 = vtanh.pop %v976
    %v991 = vrot.slane %v813, 7
    %v993 = vmul.f32 %v987, %v991
    %v994 = vmul.f32 %v986, %v989
    %v995 = vadd.f32 %v993, %v994
    %v996 = vtanh.pop %v995
    %v997 = vmul.f32 %v988, %v996
    %v999 = vrot.slane %v997, 3
    %1001 = vmatprep.subr.mxu0 %v228
    %1002 = vmatpush1.msra.mxu0 %v227
    %1003 = vmatprep.subr.mxu0 %v232
    %1004 = vmatpush1.msra.mxu0 %v231
    %1005 = vmatprep.subr.mxu0 %v236
    %1006 = vmatpush1.msra.mxu0 %v235
    %1007 = vmatprep.subr.mxu0 %v240
    %1008 = vmatpush1.msra.mxu0 %v239
    %1009 = vmatprep.subr.mxu0 %v244
    %1010 = vmatpush1.msra.mxu0 %v243
    %1011 = vmatprep.subr.mxu0 %v248
    %1012 = vmatpush1.msra.mxu0 %v247
    %1013 = vmatprep.subr.mxu0 %v252
    %1014 = vmatpush1.msra.mxu0 %v251
    %1015 = vmatprep.subr.mxu0 %v256
    %1016 = vmatpush1.msra.mxu0 %v255
    %1017 = vmatprep.subr.mxu0 %v260
    %1018 = vmatpush1.msra.mxu0 %v259
    %1019 = vmatprep.subr.mxu0 %v264
    %1020 = vmatpush1.msra.mxu0 %v263
    %1021 = vmatprep.subr.mxu0 %v268
    %1022 = vmatpush1.msra.mxu0 %v267
    %1023 = vmatprep.subr.mxu0 %v272
    %1024 = vmatpush1.msra.mxu0 %v271
    %1025 = vmatprep.subr.mxu0 %v276
    %1026 = vmatpush1.msra.mxu0 %v275
    %1027 = vmatprep.subr.mxu0 %v280
    %1028 = vmatpush1.msra.mxu0 %v279
    %1029 = vmatprep.subr.mxu0 %v284
    %1030 = vmatpush1.msra.mxu0 %v283
    %1031 = vmatprep.subr.mxu0 %v288
    %1032 = vmatpush1.msra.mxu0 %v287
    %1033 = vmatprep.subr.mxu0 0.0
    %1034 = vmatpush1.msra.mxu0 0.0
    %1035 = vmatprep.subr.mxu0 0.0
    %1036 = vmatpush1.msra.mxu0 0.0
    %1037 = vmatprep.subr.mxu0 0.0
    %1038 = vmatpush1.msra.mxu0 0.0
    %1039 = vmatprep.subr.mxu0 0.0
    %1040 = vmatpush1.msra.mxu0 0.0
    %1041 = vmatprep.subr.mxu0 0.0
    %1042 = vmatpush1.msra.mxu0 0.0
    %1043 = vmatprep.subr.mxu0 0.0
    %1044 = vmatpush1.msra.mxu0 0.0
    %1045 = vmatprep.subr.mxu0 0.0
    %1046 = vmatpush1.msra.mxu0 0.0
    %1047 = vmatprep.subr.mxu0 0.0
    %1048 = vmatpush1.msra.mxu0 0.0
    %1049 = vmatprep.subr.mxu0 0.0
    %1050 = vmatpush1.msra.mxu0 0.0
    %1051 = vmatprep.subr.mxu0 0.0
    %1052 = vmatpush1.msra.mxu0 0.0
    %1053 = vmatprep.subr.mxu0 0.0
    %1054 = vmatpush1.msra.mxu0 0.0
    %1055 = vmatprep.subr.mxu0 0.0
    %1056 = vmatpush1.msra.mxu0 0.0
    %1057 = vmatprep.subr.mxu0 0.0
    %1058 = vmatpush1.msra.mxu0 0.0
    %1059 = vmatprep.subr.mxu0 0.0
    %1060 = vmatpush1.msra.mxu0 0.0
    %1061 = vmatprep.subr.mxu0 0.0
    %1062 = vmatpush1.msra.mxu0 0.0
    %1063 = vmatprep.subr.mxu0 0.0
    %1064 = vmatpush1.msra.mxu0 0.0
    %1065 = vmatprep.mubr.f32.mxu0 0.0
    %1066 = vmatmul.mubr.f32.gmra.mrb[0].mxu0 %v999
    %v1067 = vpop.f32.mrb[0].mxu0
    %v1068 = vadd.f32 0.0, %v1067
    %v1069 = vpop.f32.mrb[0].mxu0
    %v1070 = vadd.f32 0.0, %v1069
    %1071 = vdwg.mxu0
    %1072 = vmatprep.subr.mxu0 %v230
    %1073 = vmatpush1.msra.mxu0 %v229
    %1074 = vmatprep.subr.mxu0 %v234
    %1075 = vmatpush1.msra.mxu0 %v233
    %1076 = vmatprep.subr.mxu0 %v238
    %1077 = vmatpush1.msra.mxu0 %v237
    %1078 = vmatprep.subr.mxu0 %v242
    %1079 = vmatpush1.msra.mxu0 %v241
    %1080 = vmatprep.subr.mxu0 %v246
    %1081 = vmatpush1.msra.mxu0 %v245
    %1082 = vmatprep.subr.mxu0 %v250
    %1083 = vmatpush1.msra.mxu0 %v249
    %1084 = vmatprep.subr.mxu0 %v254
    %1085 = vmatpush1.msra.mxu0 %v253
    %1086 = vmatprep.subr.mxu0 %v258
    %1087 = vmatpush1.msra.mxu0 %v257
    %1088 = vmatprep.subr.mxu0 %v262
    %1089 = vmatpush1.msra.mxu0 %v261
    %1090 = vmatprep.subr.mxu0 %v266
    %1091 = vmatpush1.msra.mxu0 %v265
    %1092 = vmatprep.subr.mxu0 %v270
    %1093 = vmatpush1.msra.mxu0 %v269
    %1094 = vmatprep.subr.mxu0 %v274
    %1095 = vmatpush1.msra.mxu0 %v273
    %1096 = vmatprep.subr.mxu0 %v278
    %1097 = vmatpush1.msra.mxu0 %v277
    %1098 = vmatprep.subr.mxu0 %v282
    %1099 = vmatpush1.msra.mxu0 %v281
    %1100 = vmatprep.subr.mxu0 %v286
    %1101 = vmatpush1.msra.mxu0 %v285
    %1102 = vmatprep.subr.mxu0 %v290
    %1103 = vmatpush1.msra.mxu0 %v289
    %1104 = vmatprep.subr.mxu0 0.0
    %1105 = vmatpush1.msra.mxu0 0.0
    %1106 = vmatprep.subr.mxu0 0.0
    %1107 = vmatpush1.msra.mxu0 0.0
    %1108 = vmatprep.subr.mxu0 0.0
    %1109 = vmatpush1.msra.mxu0 0.0
    %1110 = vmatprep.subr.mxu0 0.0
    %1111 = vmatpush1.msra.mxu0 0.0
    %1112 = vmatprep.subr.mxu0 0.0
    %1113 = vmatpush1.msra.mxu0 0.0
    %1114 = vmatprep.subr.mxu0 0.0
    %1115 = vmatpush1.msra.mxu0 0.0
    %1116 = vmatprep.subr.mxu0 0.0
    %1117 = vmatpush1.msra.mxu0 0.0
    %1118 = vmatprep.subr.mxu0 0.0
    %1119 = vmatpush1.msra.mxu0 0.0
    %1120 = vmatprep.subr.mxu0 0.0
    %1121 = vmatpush1.msra.mxu0 0.0
    %1122 = vmatprep.subr.mxu0 0.0
    %1123 = vmatpush1.msra.mxu0 0.0
    %1124 = vmatprep.subr.mxu0 0.0
    %1125 = vmatpush1.msra.mxu0 0.0
    %1126 = vmatprep.subr.mxu0 0.0
    %1127 = vmatpush1.msra.mxu0 0.0
    %1128 = vmatprep.subr.mxu0 0.0
    %1129 = vmatpush1.msra.mxu0 0.0
    %1130 = vmatprep.subr.mxu0 0.0
    %1131 = vmatpush1.msra.mxu0 0.0
    %1132 = vmatprep.subr.mxu0 0.0
    %1133 = vmatpush1.msra.mxu0 0.0
    %1134 = vmatprep.subr.mxu0 0.0
    %1135 = vmatpush1.msra.mxu0 0.0
    %1136 = vmatprep.mubr.f32.mxu0 0.0
    %1137 = vmatmul.mubr.f32.gmra.mrb[0].mxu0 %v999
    %v1138 = vpop.f32.mrb[0].mxu0
    %v1139 = vadd.f32 0.0, %v1138
    %v1140 = vpop.f32.mrb[0].mxu0
    %v1141 = vadd.f32 0.0, %v1140
    %1142 = vdwg.mxu0
    %v1147 = vrot.slane %v1068, 4
    %v1148 = vrot.slane %v1070, 4
    %v1149 = vrot.slane %v1139, 4
    %v1150 = vrot.slane %v1141, 4
    %v1155 = vadd.f32 %v152, %v1147
    %v1156 = vadd.f32 %v154, %v1148
    %v1157 = vadd.f32 %v223, %v1149
    %v1158 = vadd.f32 %v225, %v1150
    %v1159 = vmul.f32 %v1155, 0.5
    %v1160 = vmul.f32 %v1156, 0.5
    %v1161 = vmul.f32 %v1157, 0.5
    %v1162 = vtanh.pop %v1159
    %v1163 = vtanh.pop %v1160
    %v1164 = vtanh.pop %v1161
    %v1165 = vmul.f32 %v1162, 0.5
    %v1166 = vmul.f32 %v1163, 0.5
    %v1167 = vmul.f32 %v1164, 0.5
    %v1168 = vadd.f32 %v1165, 0.5
    %v1169 = vadd.f32 %v1166, 0.5
    %v1170 = vadd.f32 %v1167, 0.5
    %v1171 = vtanh.pop %v1158
    %v1173 = vrot.slane %v995, 7
    %v1175 = vmul.f32 %v1169, %v1173
    %v1176 = vmul.f32 %v1168, %v1171
    %v1177 = vadd.f32 %v1175, %v1176
    %v1178 = vtanh.pop %v1177
    %v1179 = vmul.f32 %v1170, %v1178
    %v1181 = vrot.slane %v1179, 4
    %1183 = vmatprep.subr.mxu0 %v228
    %1184 = vmatpush1.msra.mxu0 %v227
    %1185 = vmatprep.subr.mxu0 %v232
    %1186 = vmatpush1.msra.mxu0 %v231
    %1187 = vmatprep.subr.mxu0 %v236
    %1188 = vmatpush1.msra.mxu0 %v235
    %1189 = vmatprep.subr.mxu0 %v240
    %1190 = vmatpush1.msra.mxu0 %v239
    %1191 = vmatprep.subr.mxu0 %v244
    %1192 = vmatpush1.msra.mxu0 %v243
    %1193 = vmatprep.subr.mxu0 %v248
    %1194 = vmatpush1.msra.mxu0 %v247
    %1195 = vmatprep.subr.mxu0 %v252
    %1196 = vmatpush1.msra.mxu0 %v251
    %1197 = vmatprep.subr.mxu0 %v256
    %1198 = vmatpush1.msra.mxu0 %v255
    %1199 = vmatprep.subr.mxu0 %v260
    %1200 = vmatpush1.msra.mxu0 %v259
    %1201 = vmatprep.subr.mxu0 %v264
    %1202 = vmatpush1.msra.mxu0 %v263
    %1203 = vmatprep.subr.mxu0 %v268
    %1204 = vmatpush1.msra.mxu0 %v267
    %1205 = vmatprep.subr.mxu0 %v272
    %1206 = vmatpush1.msra.mxu0 %v271
    %1207 = vmatprep.subr.mxu0 %v276
    %1208 = vmatpush1.msra.mxu0 %v275
    %1209 = vmatprep.subr.mxu0 %v280
    %1210 = vmatpush1.msra.mxu0 %v279
    %1211 = vmatprep.subr.mxu0 %v284
    %1212 = vmatpush1.msra.mxu0 %v283
    %1213 = vmatprep.subr.mxu0 %v288
    %1214 = vmatpush1.msra.mxu0 %v287
    %1215 = vmatprep.subr.mxu0 0.0
    %1216 = vmatpush1.msra.mxu0 0.0
    %1217 = vmatprep.subr.mxu0 0.0
    %1218 = vmatpush1.msra.mxu0 0.0
    %1219 = vmatprep.subr.mxu0 0.0
    %1220 = vmatpush1.msra.mxu0 0.0
    %1221 = vmatprep.subr.mxu0 0.0
    %1222 = vmatpush1.msra.mxu0 0.0
    %1223 = vmatprep.subr.mxu0 0.0
    %1224 = vmatpush1.msra.mxu0 0.0
    %1225 = vmatprep.subr.mxu0 0.0
    %1226 = vmatpush1.msra.mxu0 0.0
    %1227 = vmatprep.subr.mxu0 0.0
    %1228 = vmatpush1.msra.mxu0 0.0
    %1229 = vmatprep.subr.mxu0 0.0
    %1230 = vmatpush1.msra.mxu0 0.0
    %1231 = vmatprep.subr.mxu0 0.0
    %1232 = vmatpush1.msra.mxu0 0.0
    %1233 = vmatprep.subr.mxu0 0.0
    %1234 = vmatpush1.msra.mxu0 0.0
    %1235 = vmatprep.subr.mxu0 0.0
    %1236 = vmatpush1.msra.mxu0 0.0
    %1237 = vmatprep.subr.mxu0 0.0
    %1238 = vmatpush1.msra.mxu0 0.0
    %1239 = vmatprep.subr.mxu0 0.0
    %1240 = vmatpush1.msra.mxu0 0.0
    %1241 = vmatprep.subr.mxu0 0.0
    %1242 = vmatpush1.msra.mxu0 0.0
    %1243 = vmatprep.subr.mxu0 0.0
    %1244 = vmatpush1.msra.mxu0 0.0
    %1245 = vmatprep.subr.mxu0 0.0
    %1246 = vmatpush1.msra.mxu0 0.0
    %1247 = vmatprep.mubr.f32.mxu0 0.0
    %1248 = vmatmul.mubr.f32.gmra.mrb[0].mxu0 %v1181
    %v1249 = vpop.f32.mrb[0].mxu0
    %v1250 = vadd.f32 0.0, %v1249
    %v1251 = vpop.f32.mrb[0].mxu0
    %v1252 = vadd.f32 0.0, %v1251
    %1253 = vdwg.mxu0
    %1254 = vmatprep.subr.mxu0 %v230
    %1255 = vmatpush1.msra.mxu0 %v229
    %1256 = vmatprep.subr.mxu0 %v234
    %1257 = vmatpush1.msra.mxu0 %v233
    %1258 = vmatprep.subr.mxu0 %v238
    %1259 = vmatpush1.msra.mxu0 %v237
    %1260 = vmatprep.subr.mxu0 %v242
    %1261 = vmatpush1.msra.mxu0 %v241
    %1262 = vmatprep.subr.mxu0 %v246
    %1263 = vmatpush1.msra.mxu0 %v245
    %1264 = vmatprep.subr.mxu0 %v250
    %1265 = vmatpush1.msra.mxu0 %v249
    %1266 = vmatprep.subr.mxu0 %v254
    %1267 = vmatpush1.msra.mxu0 %v253
    %1268 = vmatprep.subr.mxu0 %v258
    %1269 = vmatpush1.msra.mxu0 %v257
    %1270 = vmatprep.subr.mxu0 %v262
    %1271 = vmatpush1.msra.mxu0 %v261
    %1272 = vmatprep.subr.mxu0 %v266
    %1273 = vmatpush1.msra.mxu0 %v265
    %1274 = vmatprep.subr.mxu0 %v270
    %1275 = vmatpush1.msra.mxu0 %v269
    %1276 = vmatprep.subr.mxu0 %v274
    %1277 = vmatpush1.msra.mxu0 %v273
    %1278 = vmatprep.subr.mxu0 %v278
    %1279 = vmatpush1.msra.mxu0 %v277
    %1280 = vmatprep.subr.mxu0 %v282
    %1281 = vmatpush1.msra.mxu0 %v281
    %1282 = vmatprep.subr.mxu0 %v286
    %1283 = vmatpush1.msra.mxu0 %v285
    %1284 = vmatprep.subr.mxu0 %v290
    %1285 = vmatpush1.msra.mxu0 %v289
    %1286 = vmatprep.subr.mxu0 0.0
    %1287 = vmatpush1.msra.mxu0 0.0
    %1288 = vmatprep.subr.mxu0 0.0
    %1289 = vmatpush1.msra.mxu0 0.0
    %1290 = vmatprep.subr.mxu0 0.0
    %1291 = vmatpush1.msra.mxu0 0.0
    %1292 = vmatprep.subr.mxu0 0.0
    %1293 = vmatpush1.msra.mxu0 0.0
    %1294 = vmatprep.subr.mxu0 0.0
    %1295 = vmatpush1.msra.mxu0 0.0
    %1296 = vmatprep.subr.mxu0 0.0
    %1297 = vmatpush1.msra.mxu0 0.0
    %1298 = vmatprep.subr.mxu0 0.0
    %1299 = vmatpush1.msra.mxu0 0.0
    %1300 = vmatprep.subr.mxu0 0.0
    %1301 = vmatpush1.msra.mxu0 0.0
    %1302 = vmatprep.subr.mxu0 0.0
    %1303 = vmatpush1.msra.mxu0 0.0
    %1304 = vmatprep.subr.mxu0 0.0
    %1305 = vmatpush1.msra.mxu0 0.0
    %1306 = vmatprep.subr.mxu0 0.0
    %1307 = vmatpush1.msra.mxu0 0.0
    %1308 = vmatprep.subr.mxu0 0.0
    %1309 = vmatpush1.msra.mxu0 0.0
    %1310 = vmatprep.subr.mxu0 0.0
    %1311 = vmatpush1.msra.mxu0 0.0
    %1312 = vmatprep.subr.mxu0 0.0
    %1313 = vmatpush1.msra.mxu0 0.0
    %1314 = vmatprep.subr.mxu0 0.0
    %1315 = vmatpush1.msra.mxu0 0.0
    %1316 = vmatprep.subr.mxu0 0.0
    %1317 = vmatpush1.msra.mxu0 0.0
    %1318 = vmatprep.mubr.f32.mxu0 0.0
    %1319 = vmatmul.mubr.f32.gmra.mrb[0].mxu0 %v1181
    %v1320 = vpop.f32.mrb[0].mxu0
    %v1321 = vadd.f32 0.0, %v1320
    %v1322 = vpop.f32.mrb[0].mxu0
    %v1323 = vadd.f32 0.0, %v1322
    %1324 = vdwg.mxu0
    %v1329 = vrot.slane %v1250, 3
    %v1330 = vrot.slane %v1252, 3
    %v1331 = vrot.slane %v1321, 3
    %v1332 = vrot.slane %v1323, 3
    %v1337 = vadd.f32 %v152, %v1329
    %v1338 = vadd.f32 %v154, %v1330
    %v1339 = vadd.f32 %v223, %v1331
    %v1340 = vadd.f32 %v225, %v1332
    %v1341 = vmul.f32 %v1337, 0.5
    %v1342 = vmul.f32 %v1338, 0.5
    %v1343 = vmul.f32 %v1339, 0.5
    %v1344 = vtanh.pop %v1341
    %v1345 = vtanh.pop %v1342
    %v1346 = vtanh.pop %v1343
    %v1347 = vmul.f32 %v1344, 0.5
    %v1348 = vmul.f32 %v1345, 0.5
    %v1349 = vmul.f32 %v1346, 0.5
    %v1350 = vadd.f32 %v1347, 0.5
    %v1351 = vadd.f32 %v1348, 0.5
    %v1352 = vadd.f32 %v1349, 0.5
    %v1353 = vtanh.pop %v1340
    %v1355 = vrot.slane %v1177, 7
    %v1357 = vmul.f32 %v1351, %v1355
    %v1358 = vmul.f32 %v1350, %v1353
    %v1359 = vadd.f32 %v1357, %v1358
    %v1360 = vtanh.pop %v1359
    %v1361 = vmul.f32 %v1352, %v1360
    %v1363 = vrot.slane %v1361, 5
    %1365 = vmatprep.subr.mxu0 %v228
    %1366 = vmatpush1.msra.mxu0 %v227
    %1367 = vmatprep.subr.mxu0 %v232
    %1368 = vmatpush1.msra.mxu0 %v231
    %1369 = vmatprep.subr.mxu0 %v236
    %1370 = vmatpush1.msra.mxu0 %v235
    %1371 = vmatprep.subr.mxu0 %v240
    %1372 = vmatpush1.msra.mxu0 %v239
    %1373 = vmatprep.subr.mxu0 %v244
    %1374 = vmatpush1.msra.mxu0 %v243
    %1375 = vmatprep.subr.mxu0 %v248
    %1376 = vmatpush1.msra.mxu0 %v247
    %1377 = vmatprep.subr.mxu0 %v252
    %1378 = vmatpush1.msra.mxu0 %v251
    %1379 = vmatprep.subr.mxu0 %v256
    %1380 = vmatpush1.msra.mxu0 %v255
    %1381 = vmatprep.subr.mxu0 %v260
    %1382 = vmatpush1.msra.mxu0 %v259
    %1383 = vmatprep.subr.mxu0 %v264
    %1384 = vmatpush1.msra.mxu0 %v263
    %1385 = vmatprep.subr.mxu0 %v268
    %1386 = vmatpush1.msra.mxu0 %v267
    %1387 = vmatprep.subr.mxu0 %v272
    %1388 = vmatpush1.msra.mxu0 %v271
    %1389 = vmatprep.subr.mxu0 %v276
    %1390 = vmatpush1.msra.mxu0 %v275
    %1391 = vmatprep.subr.mxu0 %v280
    %1392 = vmatpush1.msra.mxu0 %v279
    %1393 = vmatprep.subr.mxu0 %v284
    %1394 = vmatpush1.msra.mxu0 %v283
    %1395 = vmatprep.subr.mxu0 %v288
    %1396 = vmatpush1.msra.mxu0 %v287
    %1397 = vmatprep.subr.mxu0 0.0
    %1398 = vmatpush1.msra.mxu0 0.0
    %1399 = vmatprep.subr.mxu0 0.0
    %1400 = vmatpush1.msra.mxu0 0.0
    %1401 = vmatprep.subr.mxu0 0.0
    %1402 = vmatpush1.msra.mxu0 0.0
    %1403 = vmatprep.subr.mxu0 0.0
    %1404 = vmatpush1.msra.mxu0 0.0
    %1405 = vmatprep.subr.mxu0 0.0
    %1406 = vmatpush1.msra.mxu0 0.0
    %1407 = vmatprep.subr.mxu0 0.0
    %1408 = vmatpush1.msra.mxu0 0.0
    %1409 = vmatprep.subr.mxu0 0.0
    %1410 = vmatpush1.msra.mxu0 0.0
    %1411 = vmatprep.subr.mxu0 0.0
    %1412 = vmatpush1.msra.mxu0 0.0
    %1413 = vmatprep.subr.mxu0 0.0
    %1414 = vmatpush1.msra.mxu0 0.0
    %1415 = vmatprep.subr.mxu0 0.0
    %1416 = vmatpush1.msra.mxu0 0.0
    %1417 = vmatprep.subr.mxu0 0.0
    %1418 = vmatpush1.msra.mxu0 0.0
    %1419 = vmatprep.subr.mxu0 0.0
    %1420 = vmatpush1.msra.mxu0 0.0
    %1421 = vmatprep.subr.mxu0 0.0
    %1422 = vmatpush1.msra.mxu0 0.0
    %1423 = vmatprep.subr.mxu0 0.0
    %1424 = vmatpush1.msra.mxu0 0.0
    %1425 = vmatprep.subr.mxu0 0.0
    %1426 = vmatpush1.msra.mxu0 0.0
    %1427 = vmatprep.subr.mxu0 0.0
    %1428 = vmatpush1.msra.mxu0 0.0
    %1429 = vmatprep.mubr.f32.mxu0 0.0
    %1430 = vmatmul.mubr.f32.gmra.mrb[0].mxu0 %v1363
    %v1431 = vpop.f32.mrb[0].mxu0
    %v1432 = vadd.f32 0.0, %v1431
    %v1433 = vpop.f32.mrb[0].mxu0
    %v1434 = vadd.f32 0.0, %v1433
    %1435 = vdwg.mxu0
    %1436 = vmatprep.subr.mxu0 %v230
    %1437 = vmatpush1.msra.mxu0 %v229
    %1438 = vmatprep.subr.mxu0 %v234
    %1439 = vmatpush1.msra.mxu0 %v233
    %1440 = vmatprep.subr.mxu0 %v238
    %1441 = vmatpush1.msra.mxu0 %v237
    %1442 = vmatprep.subr.mxu0 %v242
    %1443 = vmatpush1.msra.mxu0 %v241
    %1444 = vmatprep.subr.mxu0 %v246
    %1445 = vmatpush1.msra.mxu0 %v245
    %1446 = vmatprep.subr.mxu0 %v250
    %1447 = vmatpush1.msra.mxu0 %v249
    %1448 = vmatprep.subr.mxu0 %v254
    %1449 = vmatpush1.msra.mxu0 %v253
    %1450 = vmatprep.subr.mxu0 %v258
    %1451 = vmatpush1.msra.mxu0 %v257
    %1452 = vmatprep.subr.mxu0 %v262
    %1453 = vmatpush1.msra.mxu0 %v261
    %1454 = vmatprep.subr.mxu0 %v266
    %1455 = vmatpush1.msra.mxu0 %v265
    %1456 = vmatprep.subr.mxu0 %v270
    %1457 = vmatpush1.msra.mxu0 %v269
    %1458 = vmatprep.subr.mxu0 %v274
    %1459 = vmatpush1.msra.mxu0 %v273
    %1460 = vmatprep.subr.mxu0 %v278
    %1461 = vmatpush1.msra.mxu0 %v277
    %1462 = vmatprep.subr.mxu0 %v282
    %1463 = vmatpush1.msra.mxu0 %v281
    %1464 = vmatprep.subr.mxu0 %v286
    %1465 = vmatpush1.msra.mxu0 %v285
    %1466 = vmatprep.subr.mxu0 %v290
    %1467 = vmatpush1.msra.mxu0 %v289
    %1468 = vmatprep.subr.mxu0 0.0
    %1469 = vmatpush1.msra.mxu0 0.0
    %1470 = vmatprep.subr.mxu0 0.0
    %1471 = vmatpush1.msra.mxu0 0.0
    %1472 = vmatprep.subr.mxu0 0.0
    %1473 = vmatpush1.msra.mxu0 0.0
    %1474 = vmatprep.subr.mxu0 0.0
    %1475 = vmatpush1.msra.mxu0 0.0
    %1476 = vmatprep.subr.mxu0 0.0
    %1477 = vmatpush1.msra.mxu0 0.0
    %1478 = vmatprep.subr.mxu0 0.0
    %1479 = vmatpush1.msra.mxu0 0.0
    %1480 = vmatprep.subr.mxu0 0.0
    %1481 = vmatpush1.msra.mxu0 0.0
    %1482 = vmatprep.subr.mxu0 0.0
    %1483 = vmatpush1.msra.mxu0 0.0
    %1484 = vmatprep.subr.mxu0 0.0
    %1485 = vmatpush1.msra.mxu0 0.0
    %1486 = vmatprep.subr.mxu0 0.0
    %1487 = vmatpush1.msra.mxu0 0.0
    %1488 = vmatprep.subr.mxu0 0.0
    %1489 = vmatpush1.msra.mxu0 0.0
    %1490 = vmatprep.subr.mxu0 0.0
    %1491 = vmatpush1.msra.mxu0 0.0
    %1492 = vmatprep.subr.mxu0 0.0
    %1493 = vmatpush1.msra.mxu0 0.0
    %1494 = vmatprep.subr.mxu0 0.0
    %1495 = vmatpush1.msra.mxu0 0.0
    %1496 = vmatprep.subr.mxu0 0.0
    %1497 = vmatpush1.msra.mxu0 0.0
    %1498 = vmatprep.subr.mxu0 0.0
    %1499 = vmatpush1.msra.mxu0 0.0
    %1500 = vmatprep.mubr.f32.mxu0 0.0
    %1501 = vmatmul.mubr.f32.gmra.mrb[0].mxu0 %v1363
    %v1502 = vpop.f32.mrb[0].mxu0
    %v1503 = vadd.f32 0.0, %v1502
    %v1504 = vpop.f32.mrb[0].mxu0
    %v1505 = vadd.f32 0.0, %v1504
    %1506 = vdwg.mxu0
    %v1511 = vrot.slane %v1432, 2
    %v1512 = vrot.slane %v1434, 2
    %v1513 = vrot.slane %v1503, 2
    %v1514 = vrot.slane %v1505, 2
    %v1519 = vadd.f32 %v152, %v1511
    %v1520 = vadd.f32 %v154, %v1512
    %v1521 = vadd.f32 %v223, %v1513
    %v1522 = vadd.f32 %v225, %v1514
    %v1523 = vmul.f32 %v1519, 0.5
    %v1524 = vmul.f32 %v1520, 0.5
    %v1525 = vmul.f32 %v1521, 0.5
    %v1526 = vtanh.pop %v1523
    %v1527 = vtanh.pop %v1524
    %v1528 = vtanh.pop %v1525
    %v1529 = vmul.f32 %v1526, 0.5
    %v1530 = vmul.f32 %v1527, 0.5
    %v1531 = vmul.f32 %v1528, 0.5
    %v1532 = vadd.f32 %v1529, 0.5
    %v1533 = vadd.f32 %v1530, 0.5
    %v1534 = vadd.f32 %v1531, 0.5
    %v1535 = vtanh.pop %v1522
    %v1537 = vrot.slane %v1359, 7
    %v1539 = vmul.f32 %v1533, %v1537
    %v1540 = vmul.f32 %v1532, %v1535
    %v1541 = vadd.f32 %v1539, %v1540
    %v1542 = vtanh.pop %v1541
    %v1543 = vmul.f32 %v1534, %v1542
    %v1545 = vrot.slane %v1543, 6
    %1547 = vmatprep.subr.mxu0 %v228
    %1548 = vmatpush1.msra.mxu0 %v227
    %1549 = vmatprep.subr.mxu0 %v232
    %1550 = vmatpush1.msra.mxu0 %v231
    %1551 = vmatprep.subr.mxu0 %v236
    %1552 = vmatpush1.msra.mxu0 %v235
    %1553 = vmatprep.subr.mxu0 %v240
    %1554 = vmatpush1.msra.mxu0 %v239
    %1555 = vmatprep.subr.mxu0 %v244
    %1556 = vmatpush1.msra.mxu0 %v243
    %1557 = vmatprep.subr.mxu0 %v248
    %1558 = vmatpush1.msra.mxu0 %v247
    %1559 = vmatprep.subr.mxu0 %v252
    %1560 = vmatpush1.msra.mxu0 %v251
    %1561 = vmatprep.subr.mxu0 %v256
    %1562 = vmatpush1.msra.mxu0 %v255
    %1563 = vmatprep.subr.mxu0 %v260
    %1564 = vmatpush1.msra.mxu0 %v259
    %1565 = vmatprep.subr.mxu0 %v264
    %1566 = vmatpush1.msra.mxu0 %v263
    %1567 = vmatprep.subr.mxu0 %v268
    %1568 = vmatpush1.msra.mxu0 %v267
    %1569 = vmatprep.subr.mxu0 %v272
    %1570 = vmatpush1.msra.mxu0 %v271
    %1571 = vmatprep.subr.mxu0 %v276
    %1572 = vmatpush1.msra.mxu0 %v275
    %1573 = vmatprep.subr.mxu0 %v280
    %1574 = vmatpush1.msra.mxu0 %v279
    %1575 = vmatprep.subr.mxu0 %v284
    %1576 = vmatpush1.msra.mxu0 %v283
    %1577 = vmatprep.subr.mxu0 %v288
    %1578 = vmatpush1.msra.mxu0 %v287
    %1579 = vmatprep.subr.mxu0 0.0
    %1580 = vmatpush1.msra.mxu0 0.0
    %1581 = vmatprep.subr.mxu0 0.0
    %1582 = vmatpush1.msra.mxu0 0.0
    %1583 = vmatprep.subr.mxu0 0.0
    %1584 = vmatpush1.msra.mxu0 0.0
    %1585 = vmatprep.subr.mxu0 0.0
    %1586 = vmatpush1.msra.mxu0 0.0
    %1587 = vmatprep.subr.mxu0 0.0
    %1588 = vmatpush1.msra.mxu0 0.0
    %1589 = vmatprep.subr.mxu0 0.0
    %1590 = vmatpush1.msra.mxu0 0.0
    %1591 = vmatprep.subr.mxu0 0.0
    %1592 = vmatpush1.msra.mxu0 0.0
    %1593 = vmatprep.subr.mxu0 0.0
    %1594 = vmatpush1.msra.mxu0 0.0
    %1595 = vmatprep.subr.mxu0 0.0
    %1596 = vmatpush1.msra.mxu0 0.0
    %1597 = vmatprep.subr.mxu0 0.0
    %1598 = vmatpush1.msra.mxu0 0.0
    %1599 = vmatprep.subr.mxu0 0.0
    %1600 = vmatpush1.msra.mxu0 0.0
    %1601 = vmatprep.subr.mxu0 0.0
    %1602 = vmatpush1.msra.mxu0 0.0
    %1603 = vmatprep.subr.mxu0 0.0
    %1604 = vmatpush1.msra.mxu0 0.0
    %1605 = vmatprep.subr.mxu0 0.0
    %1606 = vmatpush1.msra.mxu0 0.0
    %1607 = vmatprep.subr.mxu0 0.0
    %1608 = vmatpush1.msra.mxu0 0.0
    %1609 = vmatprep.subr.mxu0 0.0
    %1610 = vmatpush1.msra.mxu0 0.0
    %1611 = vmatprep.mubr.f32.mxu0 0.0
    %1612 = vmatmul.mubr.f32.gmra.mrb[0].mxu0 %v1545
    %v1613 = vpop.f32.mrb[0].mxu0
    %v1614 = vadd.f32 0.0, %v1613
    %v1615 = vpop.f32.mrb[0].mxu0
    %v1616 = vadd.f32 0.0, %v1615
    %1617 = vdwg.mxu0
    %1618 = vmatprep.subr.mxu0 %v230
    %1619 = vmatpush1.msra.mxu0 %v229
    %1620 = vmatprep.subr.mxu0 %v234
    %1621 = vmatpush1.msra.mxu0 %v233
    %1622 = vmatprep.subr.mxu0 %v238
    %1623 = vmatpush1.msra.mxu0 %v237
    %1624 = vmatprep.subr.mxu0 %v242
    %1625 = vmatpush1.msra.mxu0 %v241
    %1626 = vmatprep.subr.mxu0 %v246
    %1627 = vmatpush1.msra.mxu0 %v245
    %1628 = vmatprep.subr.mxu0 %v250
    %1629 = vmatpush1.msra.mxu0 %v249
    %1630 = vmatprep.subr.mxu0 %v254
    %1631 = vmatpush1.msra.mxu0 %v253
    %1632 = vmatprep.subr.mxu0 %v258
    %1633 = vmatpush1.msra.mxu0 %v257
    %1634 = vmatprep.subr.mxu0 %v262
    %1635 = vmatpush1.msra.mxu0 %v261
    %1636 = vmatprep.subr.mxu0 %v266
    %1637 = vmatpush1.msra.mxu0 %v265
    %1638 = vmatprep.subr.mxu0 %v270
    %1639 = vmatpush1.msra.mxu0 %v269
    %1640 = vmatprep.subr.mxu0 %v274
    %1641 = vmatpush1.msra.mxu0 %v273
    %1642 = vmatprep.subr.mxu0 %v278
    %1643 = vmatpush1.msra.mxu0 %v277
    %1644 = vmatprep.subr.mxu0 %v282
    %1645 = vmatpush1.msra.mxu0 %v281
    %1646 = vmatprep.subr.mxu0 %v286
    %1647 = vmatpush1.msra.mxu0 %v285
    %1648 = vmatprep.subr.mxu0 %v290
    %1649 = vmatpush1.msra.mxu0 %v289
    %1650 = vmatprep.subr.mxu0 0.0
    %1651 = vmatpush1.msra.mxu0 0.0
    %1652 = vmatprep.subr.mxu0 0.0
    %1653 = vmatpush1.msra.mxu0 0.0
    %1654 = vmatprep.subr.mxu0 0.0
    %1655 = vmatpush1.msra.mxu0 0.0
    %1656 = vmatprep.subr.mxu0 0.0
    %1657 = vmatpush1.msra.mxu0 0.0
    %1658 = vmatprep.subr.mxu0 0.0
    %1659 = vmatpush1.msra.mxu0 0.0
    %1660 = vmatprep.subr.mxu0 0.0
    %1661 = vmatpush1.msra.mxu0 0.0
    %1662 = vmatprep.subr.mxu0 0.0
    %1663 = vmatpush1.msra.mxu0 0.0
    %1664 = vmatprep.subr.mxu0 0.0
    %1665 = vmatpush1.msra.mxu0 0.0
    %1666 = vmatprep.subr.mxu0 0.0
    %1667 = vmatpush1.msra.mxu0 0.0
    %1668 = vmatprep.subr.mxu0 0.0
    %1669 = vmatpush1.msra.mxu0 0.0
    %1670 = vmatprep.subr.mxu0 0.0
    %1671 = vmatpush1.msra.mxu0 0.0
    %1672 = vmatprep.subr.mxu0 0.0
    %1673 = vmatpush1.msra.mxu0 0.0
    %1674 = vmatprep.subr.mxu0 0.0
    %1675 = vmatpush1.msra.mxu0 0.0
    %1676 = vmatprep.subr.mxu0 0.0
    %1677 = vmatpush1.msra.mxu0 0.0
    %1678 = vmatprep.subr.mxu0 0.0
    %1679 = vmatpush1.msra.mxu0 0.0
    %1680 = vmatprep.subr.mxu0 0.0
    %1681 = vmatpush1.msra.mxu0 0.0
    %1682 = vmatprep.mubr.f32.mxu0 0.0
    %1683 = vmatmul.mubr.f32.gmra.mrb[0].mxu0 %v1545
    %v1684 = vpop.f32.mrb[0].mxu0
    %v1685 = vadd.f32 0.0, %v1684
    %v1686 = vpop.f32.mrb[0].mxu0
    %v1687 = vadd.f32 0.0, %v1686
    %1688 = vdwg.mxu0
    %v1693 = vrot.slane %v1614, 1
    %v1694 = vrot.slane %v1616, 1
    %v1695 = vrot.slane %v1685, 1
    %v1696 = vrot.slane %v1687, 1
    %v1701 = vadd.f32 %v152, %v1693
    %v1702 = vadd.f32 %v154, %v1694
    %v1703 = vadd.f32 %v223, %v1695
    %v1704 = vadd.f32 %v225, %v1696
    %v1705 = vmul.f32 %v1701, 0.5
    %v1706 = vmul.f32 %v1702, 0.5
    %v1707 = vmul.f32 %v1703, 0.5
    %v1708 = vtanh.pop %v1705
    %v1709 = vtanh.pop %v1706
    %v1710 = vtanh.pop %v1707
    %v1711 = vmul.f32 %v1708, 0.5
    %v1712 = vmul.f32 %v1709, 0.5
    %v1713 = vmul.f32 %v1710, 0.5
    %v1714 = vadd.f32 %v1711, 0.5
    %v1715 = vadd.f32 %v1712, 0.5
    %v1716 = vadd.f32 %v1713, 0.5
    %v1717 = vtanh.pop %v1704
    %v1719 = vrot.slane %v1541, 7
    %v1721 = vmul.f32 %v1715, %v1719
    %v1722 = vmul.f32 %v1714, %v1717
    %v1723 = vadd.f32 %v1721, %v1722
    %v1724 = vtanh.pop %v1723
    %v1725 = vmul.f32 %v1716, %v1724
    %vm1726 = vcmask 1040384
    %v1727 = vsel %vm1726, %v454, %v633
    %vm1728 = vcmask 1041408
    %v1729 = vsel %vm1728, %v1727, %v815
    %vm1730 = vcmask 1042432
    %v1731 = vsel %vm1730, %v1729, %v997
    %vm1732 = vcmask 1043456
    %v1733 = vsel %vm1732, %v1731, %v1179
    %vm1734 = vcmask 1044480
    %v1735 = vsel %vm1734, %v1733, %v1361
    %v1736 = vsel %vm72, %v1735, %v1543
    %vm1737 = vcmask 1046528
    %v1738 = vsel %vm1737, %v1736, %v1725
    %v1739 = vld [vmem:[%s4] sm:$0xff]
    %v1740 = vld [vmem:[%s4 + $0x8] sm:$0xff]
    %v1741 = vld [vmem:[%s4 + $0x10] sm:$0xff]
    %v1742 = vld [vmem:[%s4 + $0x18] sm:$0xff]
    %v1743 = vld [vmem:[%s4 + $0x20] sm:$0xff]
    %v1744 = vld [vmem:[%s4 + $0x28] sm:$0xff]
    %v1745 = vld [vmem:[%s4 + $0x30] sm:$0xff]
    %v1746 = vld [vmem:[%s4 + $0x38] sm:$0xff]
    %v1747 = vld [vmem:[%s4 + $0x40] sm:$0xff]
    %v1748 = vld [vmem:[%s4 + $0x48] sm:$0xff]
    %v1749 = vld [vmem:[%s4 + $0x50] sm:$0xff]
    %v1750 = vld [vmem:[%s4 + $0x58] sm:$0xff]
    %v1751 = vld [vmem:[%s4 + $0x60] sm:$0xff]
    %v1752 = vld [vmem:[%s4 + $0x68] sm:$0xff]
    %v1753 = vld [vmem:[%s4 + $0x70] sm:$0xff]
    %v1754 = vld [vmem:[%s4 + $0x78] sm:$0xff]
    %v1755 = vld [vmem:[%s5] sm:$0x1]
    %v1757 = vlaneseq
    %v1758 = vshrl.u32 %v1757, 7
    %v1759 = vsub.s32 0, %v1758
    %v1760 = vrot.slane %v1755, %v1759
    %1762 = vmatprep.subr.mxu0 0.0
    %1763 = vmatpush1.msra.mxu0 %v1739
    %1764 = vmatprep.subr.mxu0 0.0
    %1765 = vmatpush1.msra.mxu0 %v1740
    %1766 = vmatprep.subr.mxu0 0.0
    %1767 = vmatpush1.msra.mxu0 %v1741
    %1768 = vmatprep.subr.mxu0 0.0
    %1769 = vmatpush1.msra.mxu0 %v1742
    %1770 = vmatprep.subr.mxu0 0.0
    %1771 = vmatpush1.msra.mxu0 %v1743
    %1772 = vmatprep.subr.mxu0 0.0
    %1773 = vmatpush1.msra.mxu0 %v1744
    %1774 = vmatprep.subr.mxu0 0.0
    %1775 = vmatpush1.msra.mxu0 %v1745
    %1776 = vmatprep.subr.mxu0 0.0
    %1777 = vmatpush1.msra.mxu0 %v1746
    %1778 = vmatprep.subr.mxu0 0.0
    %1779 = vmatpush1.msra.mxu0 %v1747
    %1780 = vmatprep.subr.mxu0 0.0
    %1781 = vmatpush1.msra.mxu0 %v1748
    %1782 = vmatprep.subr.mxu0 0.0
    %1783 = vmatpush1.msra.mxu0 %v1749
    %1784 = vmatprep.subr.mxu0 0.0
    %1785 = vmatpush1.msra.mxu0 %v1750
    %1786 = vmatprep.subr.mxu0 0.0
    %1787 = vmatpush1.msra.mxu0 %v1751
    %1788 = vmatprep.subr.mxu0 0.0
    %1789 = vmatpush1.msra.mxu0 %v1752
    %1790 = vmatprep.subr.mxu0 0.0
    %1791 = vmatpush1.msra.mxu0 %v1753
    %1792 = vmatprep.subr.mxu0 0.0
    %1793 = vmatpush1.msra.mxu0 %v1754
    %1794 = vmatprep.subr.mxu0 0.0
    %1795 = vmatpush1.msra.mxu0 0.0
    %1796 = vmatprep.subr.mxu0 0.0
    %1797 = vmatpush1.msra.mxu0 0.0
    %1798 = vmatprep.subr.mxu0 0.0
    %1799 = vmatpush1.msra.mxu0 0.0
    %1800 = vmatprep.subr.mxu0 0.0
    %1801 = vmatpush1.msra.mxu0 0.0
    %1802 = vmatprep.subr.mxu0 0.0
    %1803 = vmatpush1.msra.mxu0 0.0
    %1804 = vmatprep.subr.mxu0 0.0
    %1805 = vmatpush1.msra.mxu0 0.0
    %1806 = vmatprep.subr.mxu0 0.0
    %1807 = vmatpush1.msra.mxu0 0.0
    %1808 = vmatprep.subr.mxu0 0.0
    %1809 = vmatpush1.msra.mxu0 0.0
    %1810 = vmatprep.subr.mxu0 0.0
    %1811 = vmatpush1.msra.mxu0 0.0
    %1812 = vmatprep.subr.mxu0 0.0
    %1813 = vmatpush1.msra.mxu0 0.0
    %1814 = vmatprep.subr.mxu0 0.0
    %1815 = vmatpush1.msra.mxu0 0.0
    %1816 = vmatprep.subr.mxu0 0.0
    %1817 = vmatpush1.msra.mxu0 0.0
    %1818 = vmatprep.subr.mxu0 0.0
    %1819 = vmatpush1.msra.mxu0 0.0
    %1820 = vmatprep.subr.mxu0 0.0
    %1821 = vmatpush1.msra.mxu0 0.0
    %1822 = vmatprep.subr.mxu0 0.0
    %1823 = vmatpush1.msra.mxu0 0.0
    %1824 = vmatprep.subr.mxu0 0.0
    %1825 = vmatpush1.msra.mxu0 0.0
    %1826 = vmatprep.mubr.f32.mxu0 0.0
    %1827 = vmatmul.mubr.f32.gmra.mrb[0].mxu0 %v1738
    %v1828 = vpop.f32.mrb[0].mxu0
    %v1829 = vadd.f32 %v1760, %v1828
    %v1830 = vpop.f32.mrb[0].mxu0
    %1831 = vdwg.mxu0
    %vm1832 = vcmask 31744
    %v1833 = vsel %vm1832, %v1829, -inf
    %1834 = vmax.xlane.f32.xlu0 %v1833
    %v1835 = vpop.xlane.xlu0 %1834
    %v1836 = vsub.f32 %v1829, %v1835
    %v1837 = vmul.f32 %v1836, 1.442695
    %v1838 = vpow.pop %v1837
    %v1839 = vsel %vm1832, %v1838, 0.0
    %1840 = vadd.xlane.f32.xlu0 %v1839
    %v1841 = vpop.xlane.xlu0 %1840
    %v1842 = vrcp.pop %v1841
    %v1843 = vmul.f32 %v1841, %v1842
    %v1844 = vsub.f32 2.0, %v1843
    %v1845 = vmul.f32 %v1842, %v1844
    %v1846 = vmul.f32 %v1838, %v1845
    %1847 = vst.msk [vmem:[%s6] sm:$0xff] %vm1832, %v1846
    // Predicated region
    $region30: #{tpu_custom_call.1} parent=1 // pred_check
      _
    $region31: #{tpu_custom_call.1} parent=1 // pred_check_branch
      %1849 = sbr.rel (0) target = $region33
    $region32: #{tpu_custom_call.1} parent=1 // pred_region
      _
    $region33: #{tpu_custom_call.1} parent=1 // pred_fallthru
      _
    // Predicated region
    $region34: #{tpu_custom_call.1} parent=1 // pred_check
      _
    $region35: #{tpu_custom_call.1} parent=1 // pred_check_branch
      %1851 = sbr.rel (0) target = $region37
    $region36: #{tpu_custom_call.1} parent=1 // pred_region
      _
    $region37: #{tpu_custom_call.1} parent=1 // pred_fallthru
      _
    %1852 = vsyncpa [#allocation3], 1

</llo_original>
